<compile_context>
chip_gen: v6e
topology: v6e:2x2x1
jax: 0.10.0
libtpu: 0.0.40
codegen_flags: <defaults>
</compile_context>

<pallas_src>
import functools
import math

import jax
import jax.numpy as jnp
from jax import lax
from jax.experimental import pallas as pl
from jax.experimental.pallas import tpu as pltpu

LN_EPS = 1e-6  # Block_LayerScale uses LayerNorm(hidden_size, eps=1e-6)


def _layer_norm(x, w, b):
    # torch LayerNorm: biased variance, eps inside rsqrt
    mu = jnp.mean(x, axis=-1, keepdims=True)
    var = jnp.mean((x - mu) ** 2, axis=-1, keepdims=True)
    return (x - mu) * lax.rsqrt(var + LN_EPS) * w + b


# ---------------------------------------------------------------------------
# Pallas kernel: full block for one batch element, (S, C) resident in VMEM.
# ---------------------------------------------------------------------------
def _block_kernel(x_ref, ln1w, ln1b, wqkv, bqkv, wo, bo, g1,
                  ln2w, ln2b, w1, b1, w2, b2, g2,
                  out_ref, *maybe_wts_ref, num_heads, vis):
    wts_ref = maybe_wts_ref[0] if vis else None

    x = x_ref[...]                                     # (S, C) f32
    S, C = x.shape
    Dh = C // num_heads
    scale = 1.0 / math.sqrt(Dh)
    bf16 = jnp.bfloat16

    # ---- LayerNorm #1 (f32 VPU math) ----
    xn = _layer_norm(x, ln1w[0], ln1b[0])

    # ---- fused QKV projection: one (S, C) @ (C, 3C) bf16 MXU push, f32 accum ----
    qkv = jnp.dot(xn.astype(bf16), wqkv[...],
                  preferred_element_type=jnp.float32) + bqkv[0]

    # ---- multi-head softmax attention via per-head column slices ----
    # TODO(synk): for large num_heads convert to lax.fori_loop with pl.ds column
    #             slices (and pack ceil(128/Dh) heads per MXU call) to bound vreg
    #             live ranges; static unroll is fine for the small H tested here.
    ctx_parts = []
    for h in range(num_heads):                                   # static unroll (H small)
        q_h = qkv[:, h * Dh:(h + 1) * Dh].astype(bf16)           # (S, Dh)
        k_h = qkv[:, C + h * Dh: C + (h + 1) * Dh].astype(bf16)
        v_h = qkv[:, 2 * C + h * Dh: 2 * C + (h + 1) * Dh].astype(bf16)

        sc = lax.dot_general(q_h, k_h, (((1,), (1,)), ((), ())),
                             preferred_element_type=jnp.float32) * scale   # (S, S)
        sc = sc - jnp.max(sc, axis=-1, keepdims=True)
        e = jnp.exp(sc)
        p_att = e * pl.reciprocal(jnp.sum(e, axis=-1, keepdims=True), approx=True)
        if vis:
            wts_ref[h] = p_att                                   # attention_probs (vis)
        ctx_parts.append(jnp.dot(p_att.astype(bf16), v_h,
                                 preferred_element_type=jnp.float32))      # (S, Dh)
    ctx = jnp.concatenate(ctx_parts, axis=-1)                    # (S, C)

    attn_out = jnp.dot(ctx.astype(bf16), wo[...],
                       preferred_element_type=jnp.float32) + bo[0]

    # ---- LayerScale residual #1 ----
    x1 = x + g1[0] * attn_out

    # ---- LayerNorm #2 + MLP (Linear -> exact GELU -> Linear) ----
    xn2 = _layer_norm(x1, ln2w[0], ln2b[0])
    hdn = jnp.dot(xn2.astype(bf16), w1[...],
                  preferred_element_type=jnp.float32) + b1[0]
    hdn = 0.5 * hdn * (1.0 + lax.erf(hdn * 0.7071067811865475))  # exact GELU, f32
    mlp_out = jnp.dot(hdn.astype(bf16), w2[...],
                      preferred_element_type=jnp.float32) + b2[0]

    # ---- LayerScale residual #2 ----
    out_ref[...] = x1 + g2[0] * mlp_out


# ---------------------------------------------------------------------------
# Wrapper: grid over batch, weights resident, attention-weights output optional.
# ---------------------------------------------------------------------------
def block_layerscale(x, p, num_heads, vis=True):
    """x: (B, S, C) f32.  Returns (out (B,S,C), weights (B,H,S,S) or None)."""
    B, S, C = x.shape
    assert C % num_heads == 0, "hidden_size must divide num_heads"
    kern = functools.partial(_block_kernel, num_heads=num_heads, vis=vis)

    params = [p['ln1w'], p['ln1b'], p['wqkv'], p['bqkv'], p['wo'], p['bo'], p['g1'],
              p['ln2w'], p['ln2b'], p['w1'], p['b1'], p['w2'], p['b2'], p['g2']]

    def const_spec(a):
        nd = a.ndim
        # constant index_map -> block stays resident in VMEM across grid steps
        return pl.BlockSpec(a.shape, lambda b, _nd=nd: (0,) * _nd)

    in_specs = [pl.BlockSpec((None, S, C), lambda b: (b, 0, 0))]   # squeezed -> (S, C)
    in_specs += [const_spec(a) for a in params]

    x_out_spec = pl.BlockSpec((None, S, C), lambda b: (b, 0, 0))
    if vis:
        out_shape = (jax.ShapeDtypeStruct((B, S, C), jnp.float32),
                     jax.ShapeDtypeStruct((B, num_heads, S, S), jnp.float32))
        out_specs = [x_out_spec,
                     pl.BlockSpec((None, num_heads, S, S), lambda b: (b, 0, 0, 0))]
    else:
        out_shape = jax.ShapeDtypeStruct((B, S, C), jnp.float32)
        out_specs = x_out_spec

    res = pl.pallas_call(
        kern,
        out_shape=out_shape,
        grid_spec=pltpu.PrefetchScalarGridSpec(
            num_scalar_prefetch=0,
            grid=(B,),                     # TODO(synk): add a query-tile axis if B can be 1 (v7x)
            in_specs=in_specs,
            out_specs=out_specs,
        ),
        compiler_params=pltpu.CompilerParams(
            dimension_semantics=("parallel",),
            vmem_limit_bytes=48 * 1024 * 1024,   # above the 16/32 MiB default scoped limits
        ),
    )(x, *params)

    if vis:
        out, wts = res
        return out, wts
    return res, None


# ---------------------------------------------------------------------------
# Deterministic synthetic parameters (linear weights stored (in, out): y = x @ W + b).
# Dense matmul weights stored bf16 (MXU-native); LN/bias/gamma stay f32.
# ---------------------------------------------------------------------------
def init_params(key, C, mlp_dim, init_values=0.1):
    ks = jax.random.split(key, 12)

    def w(k, shape, scale=0.05, dtype=jnp.float32):
        return (scale * jax.random.normal(k, shape)).astype(dtype)

    bf = jnp.bfloat16
    return dict(
        ln1w=1.0 + w(ks[0], (1, C), 0.02),    ln1b=w(ks[1], (1, C), 0.02),
        wqkv=w(ks[2], (C, 3 * C), dtype=bf),  bqkv=w(ks[3], (1, 3 * C), 0.01),
        wo=w(ks[4], (C, C), dtype=bf),        bo=w(ks[5], (1, C), 0.01),
        ln2w=1.0 + w(ks[6], (1, C), 0.02),    ln2b=w(ks[7], (1, C), 0.02),
        w1=w(ks[8], (C, mlp_dim), dtype=bf),  b1=w(ks[9], (1, mlp_dim), 1e-3),
        w2=w(ks[10], (mlp_dim, C), dtype=bf), b2=w(ks[11], (1, C), 1e-3),
        g1=jnp.full((1, C), init_values, jnp.float32),   # gamma_1 (LayerScale)
        g2=jnp.full((1, C), init_values, jnp.float32),   # gamma_2 (LayerScale)
    )


# ---------------------------------------------------------------------------
# Pure-JAX reference mirroring the PyTorch forward (eval mode) for verification.
# ---------------------------------------------------------------------------
def ref_block(x, p, num_heads):
    B, S, C = x.shape
    Dh = C // num_heads
    f32 = jnp.float32
    wqkv = p['wqkv'].astype(f32); wo = p['wo'].astype(f32)
    w1 = p['w1'].astype(f32); w2 = p['w2'].astype(f32)
    h0 = x
    mu = x.mean(-1, keepdims=True)
    var = ((x - mu) ** 2).mean(-1, keepdims=True)
    xn = (x - mu) / jnp.sqrt(var + LN_EPS) * p['ln1w'][0] + p['ln1b'][0]
    qkv = xn @ wqkv + p['bqkv'][0]
    q, k, v = qkv[..., :C], qkv[..., C:2 * C], qkv[..., 2 * C:]
    qh = q.reshape(B, S, num_heads, Dh).transpose(0, 2, 1, 3)
    kh = k.reshape(B, S, num_heads, Dh).transpose(0, 2, 1, 3)
    vh = v.reshape(B, S, num_heads, Dh).transpose(0, 2, 1, 3)
    sc = jnp.einsum('bhqd,bhkd->bhqk', qh, kh) / math.sqrt(Dh)
    pr = jax.nn.softmax(sc, axis=-1)
    ctx = jnp.einsum('bhqk,bhkd->bhqd', pr, vh).transpose(0, 2, 1, 3).reshape(B, S, C)
    attn = ctx @ wo + p['bo'][0]
    x1 = h0 + p['g1'][0] * attn
    mu2 = x1.mean(-1, keepdims=True)
    var2 = ((x1 - mu2) ** 2).mean(-1, keepdims=True)
    xn2 = (x1 - mu2) / jnp.sqrt(var2 + LN_EPS) * p['ln2w'][0] + p['ln2b'][0]
    hid = xn2 @ w1 + p['b1'][0]
    hid = 0.5 * hid * (1.0 + jax.scipy.special.erf(hid * 0.7071067811865475))
    out = x1 + p['g2'][0] * (hid @ w2 + p['b2'][0])
    return out, pr


if __name__ == "__main__":
    key = jax.random.PRNGKey(0)
    B, S, C = 2, 16, 32          # hidden_states: (batch, seq, hidden_size)
    num_heads = 4
    mlp_dim = 64                 # mlp_ratio = 2

    kx, kp = jax.random.split(key)
    x = jax.random.normal(kx, (B, S, C), dtype=jnp.float32)
    p = init_params(kp, C, mlp_dim)

    out, wts = block_layerscale(x, p, num_heads, vis=True)
    out, wts = jax.block_until_ready((out, wts))

    # vis=False variant: no attention-weights output is computed or written.
    out_nv, _ = block_layerscale(x, p, num_heads, vis=False)
    out_nv = jax.block_until_ready(out_nv)

    ref_out, ref_wts = ref_block(x, p, num_heads)
    assert out.shape == (B, S, C)
    assert wts.shape == (B, num_heads, S, S)
    # bf16 MXU operands + approx reciprocal -> loosen tolerance vs the f32 reference
    err = float(jnp.max(jnp.abs(out - ref_out)))
    werr = float(jnp.max(jnp.abs(wts - ref_wts)))
    nverr = float(jnp.max(jnp.abs(out_nv - ref_out)))
    assert err < 5e-3, f"max abs err {err}"
    assert werr < 5e-3, f"max abs attention-weights err {werr}"
    assert nverr < 5e-3, f"max abs err (vis=False) {nverr}"

    print("KERNEL_OK")
</pallas_src>

<mosaic_0001>
module attributes {stable_mosaic.version = 11 : i64} {
  func.func @_block_kernel(%arg0: i32, %arg1: memref<1x16x32xf32, #tpu.memory_space<vmem>>, %arg2: memref<1x32xf32, #tpu.memory_space<vmem>>, %arg3: memref<1x32xf32, #tpu.memory_space<vmem>>, %arg4: memref<32x96xbf16, #tpu.memory_space<vmem>>, %arg5: memref<1x96xf32, #tpu.memory_space<vmem>>, %arg6: memref<32x32xbf16, #tpu.memory_space<vmem>>, %arg7: memref<1x32xf32, #tpu.memory_space<vmem>>, %arg8: memref<1x32xf32, #tpu.memory_space<vmem>>, %arg9: memref<1x32xf32, #tpu.memory_space<vmem>>, %arg10: memref<1x32xf32, #tpu.memory_space<vmem>>, %arg11: memref<32x64xbf16, #tpu.memory_space<vmem>>, %arg12: memref<1x64xf32, #tpu.memory_space<vmem>>, %arg13: memref<64x32xbf16, #tpu.memory_space<vmem>>, %arg14: memref<1x32xf32, #tpu.memory_space<vmem>>, %arg15: memref<1x32xf32, #tpu.memory_space<vmem>>, %arg16: memref<1x16x32xf32, #tpu.memory_space<vmem>>, %arg17: memref<1x4x16x16xf32, #tpu.memory_space<vmem>>) attributes {dimension_semantics = [#tpu.dimension_semantics<parallel>], iteration_bounds = array<i64: 2>, scalar_prefetch = 0 : i64, scratch_operands = 0 : i64, tpu.core_type = #tpu.core_type<tc>, window_params = [{transform_indices = @transform_0, window_bounds = array<i64: 1, 16, 32>}, {pipeline_mode = #tpu.pipeline_mode<synchronous>, transform_indices = @transform_1, window_bounds = array<i64: 1, 32>}, {pipeline_mode = #tpu.pipeline_mode<synchronous>, transform_indices = @transform_2, window_bounds = array<i64: 1, 32>}, {pipeline_mode = #tpu.pipeline_mode<synchronous>, transform_indices = @transform_3, window_bounds = array<i64: 32, 96>}, {pipeline_mode = #tpu.pipeline_mode<synchronous>, transform_indices = @transform_4, window_bounds = array<i64: 1, 96>}, {pipeline_mode = #tpu.pipeline_mode<synchronous>, transform_indices = @transform_5, window_bounds = array<i64: 32, 32>}, {pipeline_mode = #tpu.pipeline_mode<synchronous>, transform_indices = @transform_6, window_bounds = array<i64: 1, 32>}, {pipeline_mode = #tpu.pipeline_mode<synchronous>, transform_indices = @transform_7, window_bounds = array<i64: 1, 32>}, {pipeline_mode = #tpu.pipeline_mode<synchronous>, transform_indices = @transform_8, window_bounds = array<i64: 1, 32>}, {pipeline_mode = #tpu.pipeline_mode<synchronous>, transform_indices = @transform_9, window_bounds = array<i64: 1, 32>}, {pipeline_mode = #tpu.pipeline_mode<synchronous>, transform_indices = @transform_10, window_bounds = array<i64: 32, 64>}, {pipeline_mode = #tpu.pipeline_mode<synchronous>, transform_indices = @transform_11, window_bounds = array<i64: 1, 64>}, {pipeline_mode = #tpu.pipeline_mode<synchronous>, transform_indices = @transform_12, window_bounds = array<i64: 64, 32>}, {pipeline_mode = #tpu.pipeline_mode<synchronous>, transform_indices = @transform_13, window_bounds = array<i64: 1, 32>}, {pipeline_mode = #tpu.pipeline_mode<synchronous>, transform_indices = @transform_14, window_bounds = array<i64: 1, 32>}, {transform_indices = @transform_15, window_bounds = array<i64: 1, 16, 32>}, {transform_indices = @transform_16, window_bounds = array<i64: 1, 4, 16, 16>}]} {
    %c0 = arith.constant 0 : index
    %c0_0 = arith.constant 0 : index
    %c0_1 = arith.constant 0 : index
    %0 = vector.load %arg1[%c0, %c0_0, %c0_1] : memref<1x16x32xf32, #tpu.memory_space<vmem>>, vector<1x16x32xf32>
    %1 = vector.shape_cast %0 : vector<1x16x32xf32> to vector<16x32xf32>
    %c0_2 = arith.constant 0 : index
    %c0_3 = arith.constant 0 : index
    %2 = vector.load %arg2[%c0_2, %c0_3] : memref<1x32xf32, #tpu.memory_space<vmem>>, vector<1x32xf32>
    %3 = vector.shape_cast %2 : vector<1x32xf32> to vector<32xf32>
    %c0_4 = arith.constant 0 : index
    %c0_5 = arith.constant 0 : index
    %4 = vector.load %arg3[%c0_4, %c0_5] : memref<1x32xf32, #tpu.memory_space<vmem>>, vector<1x32xf32>
    %5 = vector.shape_cast %4 : vector<1x32xf32> to vector<32xf32>
    %cst = arith.constant dense<0.000000e+00> : vector<16xf32>
    %6 = vector.multi_reduction <add>, %1, %cst [1] : vector<16x32xf32> to vector<16xf32>
    %7 = vector.shape_cast %6 : vector<16xf32> to vector<16x1xf32>
    %cst_6 = arith.constant 3.200000e+01 : f32
    %8 = vector.broadcast %cst_6 : f32 to vector<16x1xf32>
    %9 = arith.divf %7, %8 : vector<16x1xf32>
    %10 = vector.broadcast %9 : vector<16x1xf32> to vector<16x32xf32>
    %11 = arith.subf %1, %10 : vector<16x32xf32>
    %12 = arith.mulf %11, %11 : vector<16x32xf32>
    %cst_7 = arith.constant dense<0.000000e+00> : vector<16xf32>
    %13 = vector.multi_reduction <add>, %12, %cst_7 [1] : vector<16x32xf32> to vector<16xf32>
    %14 = vector.shape_cast %13 : vector<16xf32> to vector<16x1xf32>
    %cst_8 = arith.constant 3.200000e+01 : f32
    %15 = vector.broadcast %cst_8 : f32 to vector<16x1xf32>
    %16 = arith.divf %14, %15 : vector<16x1xf32>
    %17 = vector.broadcast %9 : vector<16x1xf32> to vector<16x32xf32>
    %18 = arith.subf %1, %17 : vector<16x32xf32>
    %cst_9 = arith.constant 9.99999997E-7 : f32
    %19 = vector.broadcast %cst_9 : f32 to vector<16x1xf32>
    %20 = arith.addf %16, %19 : vector<16x1xf32>
    %21 = math.rsqrt %20 : vector<16x1xf32>
    %22 = vector.broadcast %21 : vector<16x1xf32> to vector<16x32xf32>
    %23 = arith.mulf %18, %22 : vector<16x32xf32>
    %24 = vector.shape_cast %3 : vector<32xf32> to vector<1x32xf32>
    %25 = vector.broadcast %24 : vector<1x32xf32> to vector<16x32xf32>
    %26 = arith.mulf %23, %25 : vector<16x32xf32>
    %27 = vector.shape_cast %5 : vector<32xf32> to vector<1x32xf32>
    %28 = vector.broadcast %27 : vector<1x32xf32> to vector<16x32xf32>
    %29 = arith.addf %26, %28 : vector<16x32xf32>
    %30 = arith.truncf %29 : vector<16x32xf32> to vector<16x32xbf16>
    %c0_10 = arith.constant 0 : index
    %c0_11 = arith.constant 0 : index
    %31 = vector.load %arg4[%c0_10, %c0_11] : memref<32x96xbf16, #tpu.memory_space<vmem>>, vector<32x96xbf16>
    %cst_12 = arith.constant dense<0.000000e+00> : vector<16x96xf32>
    %32 = tpu.matmul %30, %31, %cst_12 {dimension_numbers = #tpu.dot_dimension_numbers<[1], [0], [0], [1], [0, 0, 1, 1], [], []>} : vector<16x32xbf16>, vector<32x96xbf16>, vector<16x96xf32> -> vector<16x96xf32>
    %c0_13 = arith.constant 0 : index
    %c0_14 = arith.constant 0 : index
    %33 = vector.load %arg5[%c0_13, %c0_14] : memref<1x96xf32, #tpu.memory_space<vmem>>, vector<1x96xf32>
    %34 = vector.shape_cast %33 : vector<1x96xf32> to vector<96xf32>
    %35 = vector.shape_cast %34 : vector<96xf32> to vector<1x96xf32>
    %36 = vector.broadcast %35 : vector<1x96xf32> to vector<16x96xf32>
    %37 = arith.addf %32, %36 : vector<16x96xf32>
    %38 = vector.extract_strided_slice %37 {offsets = [0, 0], sizes = [16, 8], strides = [1, 1]} : vector<16x96xf32> to vector<16x8xf32>
    %39 = arith.truncf %38 : vector<16x8xf32> to vector<16x8xbf16>
    %40 = vector.extract_strided_slice %37 {offsets = [0, 32], sizes = [16, 8], strides = [1, 1]} : vector<16x96xf32> to vector<16x8xf32>
    %41 = arith.truncf %40 : vector<16x8xf32> to vector<16x8xbf16>
    %42 = vector.extract_strided_slice %37 {offsets = [0, 64], sizes = [16, 8], strides = [1, 1]} : vector<16x96xf32> to vector<16x8xf32>
    %43 = arith.truncf %42 : vector<16x8xf32> to vector<16x8xbf16>
    %cst_15 = arith.constant dense<0.000000e+00> : vector<16x16xf32>
    %44 = tpu.matmul %39, %41, %cst_15 {dimension_numbers = #tpu.dot_dimension_numbers<[1], [1], [0], [0], [0, 0, 1, 0], [], []>} : vector<16x8xbf16>, vector<16x8xbf16>, vector<16x16xf32> -> vector<16x16xf32>
    %cst_16 = arith.constant 0.353553385 : f32
    %45 = vector.broadcast %cst_16 : f32 to vector<16x16xf32>
    %46 = arith.mulf %44, %45 : vector<16x16xf32>
    %cst_17 = arith.constant dense<0xFF800000> : vector<16xf32>
    %47 = vector.multi_reduction <maximumf>, %46, %cst_17 [1] : vector<16x16xf32> to vector<16xf32>
    %48 = vector.shape_cast %47 : vector<16xf32> to vector<16x1xf32>
    %49 = vector.broadcast %48 : vector<16x1xf32> to vector<16x16xf32>
    %50 = arith.subf %46, %49 : vector<16x16xf32>
    %51 = math.exp %50 : vector<16x16xf32>
    %cst_18 = arith.constant dense<0.000000e+00> : vector<16xf32>
    %52 = vector.multi_reduction <add>, %51, %cst_18 [1] : vector<16x16xf32> to vector<16xf32>
    %53 = vector.shape_cast %52 : vector<16xf32> to vector<16x1xf32>
    %54 = tpu.reciprocal %53 {approx = true} : vector<16x1xf32> -> vector<16x1xf32>
    %55 = vector.broadcast %54 : vector<16x1xf32> to vector<16x16xf32>
    %56 = arith.mulf %51, %55 : vector<16x16xf32>
    %c0_19 = arith.constant 0 : index
    %c0_20 = arith.constant 0 : index
    %c0_21 = arith.constant 0 : index
    %c0_22 = arith.constant 0 : index
    %57 = vector.load %arg17[%c0_19, %c0_20, %c0_21, %c0_22] : memref<1x4x16x16xf32, #tpu.memory_space<vmem>>, vector<1x1x16x16xf32>
    %58 = vector.shape_cast %57 : vector<1x1x16x16xf32> to vector<16x16xf32>
    %59 = vector.shape_cast %56 : vector<16x16xf32> to vector<1x1x16x16xf32>
    tpu.vector_store %arg17[%c0_19, %c0_20, %c0_21, %c0_22], %59 {strides = array<i32>} : memref<1x4x16x16xf32, #tpu.memory_space<vmem>>, vector<1x1x16x16xf32>,
    %60 = arith.truncf %56 : vector<16x16xf32> to vector<16x16xbf16>
    %cst_23 = arith.constant dense<0.000000e+00> : vector<16x8xf32>
    %61 = tpu.matmul %60, %43, %cst_23 {dimension_numbers = #tpu.dot_dimension_numbers<[1], [0], [0], [1], [0, 0, 1, 1], [], []>} : vector<16x16xbf16>, vector<16x8xbf16>, vector<16x8xf32> -> vector<16x8xf32>
    %62 = vector.extract_strided_slice %37 {offsets = [0, 8], sizes = [16, 8], strides = [1, 1]} : vector<16x96xf32> to vector<16x8xf32>
    %63 = arith.truncf %62 : vector<16x8xf32> to vector<16x8xbf16>
    %64 = vector.extract_strided_slice %37 {offsets = [0, 40], sizes = [16, 8], strides = [1, 1]} : vector<16x96xf32> to vector<16x8xf32>
    %65 = arith.truncf %64 : vector<16x8xf32> to vector<16x8xbf16>
    %66 = vector.extract_strided_slice %37 {offsets = [0, 72], sizes = [16, 8], strides = [1, 1]} : vector<16x96xf32> to vector<16x8xf32>
    %67 = arith.truncf %66 : vector<16x8xf32> to vector<16x8xbf16>
    %cst_24 = arith.constant dense<0.000000e+00> : vector<16x16xf32>
    %68 = tpu.matmul %63, %65, %cst_24 {dimension_numbers = #tpu.dot_dimension_numbers<[1], [1], [0], [0], [0, 0, 1, 0], [], []>} : vector<16x8xbf16>, vector<16x8xbf16>, vector<16x16xf32> -> vector<16x16xf32>
    %cst_25 = arith.constant 0.353553385 : f32
    %69 = vector.broadcast %cst_25 : f32 to vector<16x16xf32>
    %70 = arith.mulf %68, %69 : vector<16x16xf32>
    %cst_26 = arith.constant dense<0xFF800000> : vector<16xf32>
    %71 = vector.multi_reduction <maximumf>, %70, %cst_26 [1] : vector<16x16xf32> to vector<16xf32>
    %72 = vector.shape_cast %71 : vector<16xf32> to vector<16x1xf32>
    %73 = vector.broadcast %72 : vector<16x1xf32> to vector<16x16xf32>
    %74 = arith.subf %70, %73 : vector<16x16xf32>
    %75 = math.exp %74 : vector<16x16xf32>
    %cst_27 = arith.constant dense<0.000000e+00> : vector<16xf32>
    %76 = vector.multi_reduction <add>, %75, %cst_27 [1] : vector<16x16xf32> to vector<16xf32>
    %77 = vector.shape_cast %76 : vector<16xf32> to vector<16x1xf32>
    %78 = tpu.reciprocal %77 {approx = true} : vector<16x1xf32> -> vector<16x1xf32>
    %79 = vector.broadcast %78 : vector<16x1xf32> to vector<16x16xf32>
    %80 = arith.mulf %75, %79 : vector<16x16xf32>
    %c0_28 = arith.constant 0 : index
    %c1 = arith.constant 1 : index
    %c0_29 = arith.constant 0 : index
    %c0_30 = arith.constant 0 : index
    %81 = vector.load %arg17[%c0_28, %c1, %c0_29, %c0_30] : memref<1x4x16x16xf32, #tpu.memory_space<vmem>>, vector<1x1x16x16xf32>
    %82 = vector.shape_cast %81 : vector<1x1x16x16xf32> to vector<16x16xf32>
    %83 = vector.shape_cast %80 : vector<16x16xf32> to vector<1x1x16x16xf32>
    tpu.vector_store %arg17[%c0_28, %c1, %c0_29, %c0_30], %83 {strides = array<i32>} : memref<1x4x16x16xf32, #tpu.memory_space<vmem>>, vector<1x1x16x16xf32>,
    %84 = arith.truncf %80 : vector<16x16xf32> to vector<16x16xbf16>
    %cst_31 = arith.constant dense<0.000000e+00> : vector<16x8xf32>
    %85 = tpu.matmul %84, %67, %cst_31 {dimension_numbers = #tpu.dot_dimension_numbers<[1], [0], [0], [1], [0, 0, 1, 1], [], []>} : vector<16x16xbf16>, vector<16x8xbf16>, vector<16x8xf32> -> vector<16x8xf32>
    %86 = vector.extract_strided_slice %37 {offsets = [0, 16], sizes = [16, 8], strides = [1, 1]} : vector<16x96xf32> to vector<16x8xf32>
    %87 = arith.truncf %86 : vector<16x8xf32> to vector<16x8xbf16>
    %88 = vector.extract_strided_slice %37 {offsets = [0, 48], sizes = [16, 8], strides = [1, 1]} : vector<16x96xf32> to vector<16x8xf32>
    %89 = arith.truncf %88 : vector<16x8xf32> to vector<16x8xbf16>
    %90 = vector.extract_strided_slice %37 {offsets = [0, 80], sizes = [16, 8], strides = [1, 1]} : vector<16x96xf32> to vector<16x8xf32>
    %91 = arith.truncf %90 : vector<16x8xf32> to vector<16x8xbf16>
    %cst_32 = arith.constant dense<0.000000e+00> : vector<16x16xf32>
    %92 = tpu.matmul %87, %89, %cst_32 {dimension_numbers = #tpu.dot_dimension_numbers<[1], [1], [0], [0], [0, 0, 1, 0], [], []>} : vector<16x8xbf16>, vector<16x8xbf16>, vector<16x16xf32> -> vector<16x16xf32>
    %cst_33 = arith.constant 0.353553385 : f32
    %93 = vector.broadcast %cst_33 : f32 to vector<16x16xf32>
    %94 = arith.mulf %92, %93 : vector<16x16xf32>
    %cst_34 = arith.constant dense<0xFF800000> : vector<16xf32>
    %95 = vector.multi_reduction <maximumf>, %94, %cst_34 [1] : vector<16x16xf32> to vector<16xf32>
    %96 = vector.shape_cast %95 : vector<16xf32> to vector<16x1xf32>
    %97 = vector.broadcast %96 : vector<16x1xf32> to vector<16x16xf32>
    %98 = arith.subf %94, %97 : vector<16x16xf32>
    %99 = math.exp %98 : vector<16x16xf32>
    %cst_35 = arith.constant dense<0.000000e+00> : vector<16xf32>
    %100 = vector.multi_reduction <add>, %99, %cst_35 [1] : vector<16x16xf32> to vector<16xf32>
    %101 = vector.shape_cast %100 : vector<16xf32> to vector<16x1xf32>
    %102 = tpu.reciprocal %101 {approx = true} : vector<16x1xf32> -> vector<16x1xf32>
    %103 = vector.broadcast %102 : vector<16x1xf32> to vector<16x16xf32>
    %104 = arith.mulf %99, %103 : vector<16x16xf32>
    %c0_36 = arith.constant 0 : index
    %c2 = arith.constant 2 : index
    %c0_37 = arith.constant 0 : index
    %c0_38 = arith.constant 0 : index
    %105 = vector.load %arg17[%c0_36, %c2, %c0_37, %c0_38] : memref<1x4x16x16xf32, #tpu.memory_space<vmem>>, vector<1x1x16x16xf32>
    %106 = vector.shape_cast %105 : vector<1x1x16x16xf32> to vector<16x16xf32>
    %107 = vector.shape_cast %104 : vector<16x16xf32> to vector<1x1x16x16xf32>
    tpu.vector_store %arg17[%c0_36, %c2, %c0_37, %c0_38], %107 {strides = array<i32>} : memref<1x4x16x16xf32, #tpu.memory_space<vmem>>, vector<1x1x16x16xf32>,
    %108 = arith.truncf %104 : vector<16x16xf32> to vector<16x16xbf16>
    %cst_39 = arith.constant dense<0.000000e+00> : vector<16x8xf32>
    %109 = tpu.matmul %108, %91, %cst_39 {dimension_numbers = #tpu.dot_dimension_numbers<[1], [0], [0], [1], [0, 0, 1, 1], [], []>} : vector<16x16xbf16>, vector<16x8xbf16>, vector<16x8xf32> -> vector<16x8xf32>
    %110 = vector.extract_strided_slice %37 {offsets = [0, 24], sizes = [16, 8], strides = [1, 1]} : vector<16x96xf32> to vector<16x8xf32>
    %111 = arith.truncf %110 : vector<16x8xf32> to vector<16x8xbf16>
    %112 = vector.extract_strided_slice %37 {offsets = [0, 56], sizes = [16, 8], strides = [1, 1]} : vector<16x96xf32> to vector<16x8xf32>
    %113 = arith.truncf %112 : vector<16x8xf32> to vector<16x8xbf16>
    %114 = vector.extract_strided_slice %37 {offsets = [0, 88], sizes = [16, 8], strides = [1, 1]} : vector<16x96xf32> to vector<16x8xf32>
    %115 = arith.truncf %114 : vector<16x8xf32> to vector<16x8xbf16>
    %cst_40 = arith.constant dense<0.000000e+00> : vector<16x16xf32>
    %116 = tpu.matmul %111, %113, %cst_40 {dimension_numbers = #tpu.dot_dimension_numbers<[1], [1], [0], [0], [0, 0, 1, 0], [], []>} : vector<16x8xbf16>, vector<16x8xbf16>, vector<16x16xf32> -> vector<16x16xf32>
    %cst_41 = arith.constant 0.353553385 : f32
    %117 = vector.broadcast %cst_41 : f32 to vector<16x16xf32>
    %118 = arith.mulf %116, %117 : vector<16x16xf32>
    %cst_42 = arith.constant dense<0xFF800000> : vector<16xf32>
    %119 = vector.multi_reduction <maximumf>, %118, %cst_42 [1] : vector<16x16xf32> to vector<16xf32>
    %120 = vector.shape_cast %119 : vector<16xf32> to vector<16x1xf32>
    %121 = vector.broadcast %120 : vector<16x1xf32> to vector<16x16xf32>
    %122 = arith.subf %118, %121 : vector<16x16xf32>
    %123 = math.exp %122 : vector<16x16xf32>
    %cst_43 = arith.constant dense<0.000000e+00> : vector<16xf32>
    %124 = vector.multi_reduction <add>, %123, %cst_43 [1] : vector<16x16xf32> to vector<16xf32>
    %125 = vector.shape_cast %124 : vector<16xf32> to vector<16x1xf32>
    %126 = tpu.reciprocal %125 {approx = true} : vector<16x1xf32> -> vector<16x1xf32>
    %127 = vector.broadcast %126 : vector<16x1xf32> to vector<16x16xf32>
    %128 = arith.mulf %123, %127 : vector<16x16xf32>
    %c0_44 = arith.constant 0 : index
    %c3 = arith.constant 3 : index
    %c0_45 = arith.constant 0 : index
    %c0_46 = arith.constant 0 : index
    %129 = vector.load %arg17[%c0_44, %c3, %c0_45, %c0_46] : memref<1x4x16x16xf32, #tpu.memory_space<vmem>>, vector<1x1x16x16xf32>
    %130 = vector.shape_cast %129 : vector<1x1x16x16xf32> to vector<16x16xf32>
    %131 = vector.shape_cast %128 : vector<16x16xf32> to vector<1x1x16x16xf32>
    tpu.vector_store %arg17[%c0_44, %c3, %c0_45, %c0_46], %131 {strides = array<i32>} : memref<1x4x16x16xf32, #tpu.memory_space<vmem>>, vector<1x1x16x16xf32>,
    %132 = arith.truncf %128 : vector<16x16xf32> to vector<16x16xbf16>
    %cst_47 = arith.constant dense<0.000000e+00> : vector<16x8xf32>
    %133 = tpu.matmul %132, %115, %cst_47 {dimension_numbers = #tpu.dot_dimension_numbers<[1], [0], [0], [1], [0, 0, 1, 1], [], []>} : vector<16x16xbf16>, vector<16x8xbf16>, vector<16x8xf32> -> vector<16x8xf32>
    %134 = tpu.concatenate %61, %85, %109, %133 in 1 : vector<16x8xf32>, vector<16x8xf32>, vector<16x8xf32>, vector<16x8xf32> -> vector<16x32xf32>
    %135 = arith.truncf %134 : vector<16x32xf32> to vector<16x32xbf16>
    %c0_48 = arith.constant 0 : index
    %c0_49 = arith.constant 0 : index
    %136 = vector.load %arg6[%c0_48, %c0_49] : memref<32x32xbf16, #tpu.memory_space<vmem>>, vector<32x32xbf16>
    %cst_50 = arith.constant dense<0.000000e+00> : vector<16x32xf32>
    %137 = tpu.matmul %135, %136, %cst_50 {dimension_numbers = #tpu.dot_dimension_numbers<[1], [0], [0], [1], [0, 0, 1, 1], [], []>} : vector<16x32xbf16>, vector<32x32xbf16>, vector<16x32xf32> -> vector<16x32xf32>
    %c0_51 = arith.constant 0 : index
    %c0_52 = arith.constant 0 : index
    %138 = vector.load %arg7[%c0_51, %c0_52] : memref<1x32xf32, #tpu.memory_space<vmem>>, vector<1x32xf32>
    %139 = vector.shape_cast %138 : vector<1x32xf32> to vector<32xf32>
    %140 = vector.shape_cast %139 : vector<32xf32> to vector<1x32xf32>
    %141 = vector.broadcast %140 : vector<1x32xf32> to vector<16x32xf32>
    %142 = arith.addf %137, %141 : vector<16x32xf32>
    %c0_53 = arith.constant 0 : index
    %c0_54 = arith.constant 0 : index
    %143 = vector.load %arg8[%c0_53, %c0_54] : memref<1x32xf32, #tpu.memory_space<vmem>>, vector<1x32xf32>
    %144 = vector.shape_cast %143 : vector<1x32xf32> to vector<32xf32>
    %145 = vector.shape_cast %144 : vector<32xf32> to vector<1x32xf32>
    %146 = vector.broadcast %145 : vector<1x32xf32> to vector<16x32xf32>
    %147 = arith.mulf %146, %142 : vector<16x32xf32>
    %148 = arith.addf %1, %147 : vector<16x32xf32>
    %c0_55 = arith.constant 0 : index
    %c0_56 = arith.constant 0 : index
    %149 = vector.load %arg9[%c0_55, %c0_56] : memref<1x32xf32, #tpu.memory_space<vmem>>, vector<1x32xf32>
    %150 = vector.shape_cast %149 : vector<1x32xf32> to vector<32xf32>
    %c0_57 = arith.constant 0 : index
    %c0_58 = arith.constant 0 : index
    %151 = vector.load %arg10[%c0_57, %c0_58] : memref<1x32xf32, #tpu.memory_space<vmem>>, vector<1x32xf32>
    %152 = vector.shape_cast %151 : vector<1x32xf32> to vector<32xf32>
    %cst_59 = arith.constant dense<0.000000e+00> : vector<16xf32>
    %153 = vector.multi_reduction <add>, %148, %cst_59 [1] : vector<16x32xf32> to vector<16xf32>
    %154 = vector.shape_cast %153 : vector<16xf32> to vector<16x1xf32>
    %cst_60 = arith.constant 3.200000e+01 : f32
    %155 = vector.broadcast %cst_60 : f32 to vector<16x1xf32>
    %156 = arith.divf %154, %155 : vector<16x1xf32>
    %157 = vector.broadcast %156 : vector<16x1xf32> to vector<16x32xf32>
    %158 = arith.subf %148, %157 : vector<16x32xf32>
    %159 = arith.mulf %158, %158 : vector<16x32xf32>
    %cst_61 = arith.constant dense<0.000000e+00> : vector<16xf32>
    %160 = vector.multi_reduction <add>, %159, %cst_61 [1] : vector<16x32xf32> to vector<16xf32>
    %161 = vector.shape_cast %160 : vector<16xf32> to vector<16x1xf32>
    %cst_62 = arith.constant 3.200000e+01 : f32
    %162 = vector.broadcast %cst_62 : f32 to vector<16x1xf32>
    %163 = arith.divf %161, %162 : vector<16x1xf32>
    %164 = vector.broadcast %156 : vector<16x1xf32> to vector<16x32xf32>
    %165 = arith.subf %148, %164 : vector<16x32xf32>
    %cst_63 = arith.constant 9.99999997E-7 : f32
    %166 = vector.broadcast %cst_63 : f32 to vector<16x1xf32>
    %167 = arith.addf %163, %166 : vector<16x1xf32>
    %168 = math.rsqrt %167 : vector<16x1xf32>
    %169 = vector.broadcast %168 : vector<16x1xf32> to vector<16x32xf32>
    %170 = arith.mulf %165, %169 : vector<16x32xf32>
    %171 = vector.shape_cast %150 : vector<32xf32> to vector<1x32xf32>
    %172 = vector.broadcast %171 : vector<1x32xf32> to vector<16x32xf32>
    %173 = arith.mulf %170, %172 : vector<16x32xf32>
    %174 = vector.shape_cast %152 : vector<32xf32> to vector<1x32xf32>
    %175 = vector.broadcast %174 : vector<1x32xf32> to vector<16x32xf32>
    %176 = arith.addf %173, %175 : vector<16x32xf32>
    %177 = arith.truncf %176 : vector<16x32xf32> to vector<16x32xbf16>
    %c0_64 = arith.constant 0 : index
    %c0_65 = arith.constant 0 : index
    %178 = vector.load %arg11[%c0_64, %c0_65] : memref<32x64xbf16, #tpu.memory_space<vmem>>, vector<32x64xbf16>
    %cst_66 = arith.constant dense<0.000000e+00> : vector<16x64xf32>
    %179 = tpu.matmul %177, %178, %cst_66 {dimension_numbers = #tpu.dot_dimension_numbers<[1], [0], [0], [1], [0, 0, 1, 1], [], []>} : vector<16x32xbf16>, vector<32x64xbf16>, vector<16x64xf32> -> vector<16x64xf32>
    %c0_67 = arith.constant 0 : index
    %c0_68 = arith.constant 0 : index
    %180 = vector.load %arg12[%c0_67, %c0_68] : memref<1x64xf32, #tpu.memory_space<vmem>>, vector<1x64xf32>
    %181 = vector.shape_cast %180 : vector<1x64xf32> to vector<64xf32>
    %182 = vector.shape_cast %181 : vector<64xf32> to vector<1x64xf32>
    %183 = vector.broadcast %182 : vector<1x64xf32> to vector<16x64xf32>
    %184 = arith.addf %179, %183 : vector<16x64xf32>
    %cst_69 = arith.constant 5.000000e-01 : f32
    %185 = vector.broadcast %cst_69 : f32 to vector<16x64xf32>
    %186 = arith.mulf %185, %184 : vector<16x64xf32>
    %cst_70 = arith.constant 0.707106769 : f32
    %187 = vector.broadcast %cst_70 : f32 to vector<16x64xf32>
    %188 = arith.mulf %184, %187 : vector<16x64xf32>
    %189 = math.erf %188 : vector<16x64xf32>
    %cst_71 = arith.constant 1.000000e+00 : f32
    %190 = vector.broadcast %cst_71 : f32 to vector<16x64xf32>
    %191 = arith.addf %190, %189 : vector<16x64xf32>
    %192 = arith.mulf %186, %191 : vector<16x64xf32>
    %193 = arith.truncf %192 : vector<16x64xf32> to vector<16x64xbf16>
    %c0_72 = arith.constant 0 : index
    %c0_73 = arith.constant 0 : index
    %194 = vector.load %arg13[%c0_72, %c0_73] : memref<64x32xbf16, #tpu.memory_space<vmem>>, vector<64x32xbf16>
    %cst_74 = arith.constant dense<0.000000e+00> : vector<16x32xf32>
    %195 = tpu.matmul %193, %194, %cst_74 {dimension_numbers = #tpu.dot_dimension_numbers<[1], [0], [0], [1], [0, 0, 1, 1], [], []>} : vector<16x64xbf16>, vector<64x32xbf16>, vector<16x32xf32> -> vector<16x32xf32>
    %c0_75 = arith.constant 0 : index
    %c0_76 = arith.constant 0 : index
    %196 = vector.load %arg14[%c0_75, %c0_76] : memref<1x32xf32, #tpu.memory_space<vmem>>, vector<1x32xf32>
    %197 = vector.shape_cast %196 : vector<1x32xf32> to vector<32xf32>
    %198 = vector.shape_cast %197 : vector<32xf32> to vector<1x32xf32>
    %199 = vector.broadcast %198 : vector<1x32xf32> to vector<16x32xf32>
    %200 = arith.addf %195, %199 : vector<16x32xf32>
    %c0_77 = arith.constant 0 : index
    %c0_78 = arith.constant 0 : index
    %201 = vector.load %arg15[%c0_77, %c0_78] : memref<1x32xf32, #tpu.memory_space<vmem>>, vector<1x32xf32>
    %202 = vector.shape_cast %201 : vector<1x32xf32> to vector<32xf32>
    %203 = vector.shape_cast %202 : vector<32xf32> to vector<1x32xf32>
    %204 = vector.broadcast %203 : vector<1x32xf32> to vector<16x32xf32>
    %205 = arith.mulf %204, %200 : vector<16x32xf32>
    %206 = arith.addf %148, %205 : vector<16x32xf32>
    %c0_79 = arith.constant 0 : index
    %c0_80 = arith.constant 0 : index
    %c0_81 = arith.constant 0 : index
    %207 = vector.load %arg16[%c0_79, %c0_80, %c0_81] : memref<1x16x32xf32, #tpu.memory_space<vmem>>, vector<1x16x32xf32>
    %208 = vector.shape_cast %207 : vector<1x16x32xf32> to vector<16x32xf32>
    %209 = vector.shape_cast %206 : vector<16x32xf32> to vector<1x16x32xf32>
    tpu.vector_store %arg16[%c0_79, %c0_80, %c0_81], %209 {strides = array<i32>} : memref<1x16x32xf32, #tpu.memory_space<vmem>>, vector<1x16x32xf32>,
    return
  }
  func.func @transform_0(%arg0: i32) -> (i32, i32, i32) {
    %c0_i32 = arith.constant 0 : i32
    %c0_i32_0 = arith.constant 0 : i32
    %c0_i32_1 = arith.constant 0 : i32
    return %arg0, %c0_i32, %c0_i32_0 : i32, i32, i32
  }
  func.func @transform_1(%arg0: i32) -> (i32, i32) {
    %c0_i32 = arith.constant 0 : i32
    %c0_i32_0 = arith.constant 0 : i32
    %c0_i32_1 = arith.constant 0 : i32
    return %c0_i32, %c0_i32_0 : i32, i32
  }
  func.func @transform_2(%arg0: i32) -> (i32, i32) {
    %c0_i32 = arith.constant 0 : i32
    %c0_i32_0 = arith.constant 0 : i32
    %c0_i32_1 = arith.constant 0 : i32
    return %c0_i32, %c0_i32_0 : i32, i32
  }
  func.func @transform_3(%arg0: i32) -> (i32, i32) {
    %c0_i32 = arith.constant 0 : i32
    %c0_i32_0 = arith.constant 0 : i32
    %c0_i32_1 = arith.constant 0 : i32
    return %c0_i32, %c0_i32_0 : i32, i32
  }
  func.func @transform_4(%arg0: i32) -> (i32, i32) {
    %c0_i32 = arith.constant 0 : i32
    %c0_i32_0 = arith.constant 0 : i32
    %c0_i32_1 = arith.constant 0 : i32
    return %c0_i32, %c0_i32_0 : i32, i32
  }
  func.func @transform_5(%arg0: i32) -> (i32, i32) {
    %c0_i32 = arith.constant 0 : i32
    %c0_i32_0 = arith.constant 0 : i32
    %c0_i32_1 = arith.constant 0 : i32
    return %c0_i32, %c0_i32_0 : i32, i32
  }
  func.func @transform_6(%arg0: i32) -> (i32, i32) {
    %c0_i32 = arith.constant 0 : i32
    %c0_i32_0 = arith.constant 0 : i32
    %c0_i32_1 = arith.constant 0 : i32
    return %c0_i32, %c0_i32_0 : i32, i32
  }
  func.func @transform_7(%arg0: i32) -> (i32, i32) {
    %c0_i32 = arith.constant 0 : i32
    %c0_i32_0 = arith.constant 0 : i32
    %c0_i32_1 = arith.constant 0 : i32
    return %c0_i32, %c0_i32_0 : i32, i32
  }
  func.func @transform_8(%arg0: i32) -> (i32, i32) {
    %c0_i32 = arith.constant 0 : i32
    %c0_i32_0 = arith.constant 0 : i32
    %c0_i32_1 = arith.constant 0 : i32
    return %c0_i32, %c0_i32_0 : i32, i32
  }
  func.func @transform_9(%arg0: i32) -> (i32, i32) {
    %c0_i32 = arith.constant 0 : i32
    %c0_i32_0 = arith.constant 0 : i32
    %c0_i32_1 = arith.constant 0 : i32
    return %c0_i32, %c0_i32_0 : i32, i32
  }
  func.func @transform_10(%arg0: i32) -> (i32, i32) {
    %c0_i32 = arith.constant 0 : i32
    %c0_i32_0 = arith.constant 0 : i32
    %c0_i32_1 = arith.constant 0 : i32
    return %c0_i32, %c0_i32_0 : i32, i32
  }
  func.func @transform_11(%arg0: i32) -> (i32, i32) {
    %c0_i32 = arith.constant 0 : i32
    %c0_i32_0 = arith.constant 0 : i32
    %c0_i32_1 = arith.constant 0 : i32
    return %c0_i32, %c0_i32_0 : i32, i32
  }
  func.func @transform_12(%arg0: i32) -> (i32, i32) {
    %c0_i32 = arith.constant 0 : i32
    %c0_i32_0 = arith.constant 0 : i32
    %c0_i32_1 = arith.constant 0 : i32
    return %c0_i32, %c0_i32_0 : i32, i32
  }
  func.func @transform_13(%arg0: i32) -> (i32, i32) {
    %c0_i32 = arith.constant 0 : i32
    %c0_i32_0 = arith.constant 0 : i32
    %c0_i32_1 = arith.constant 0 : i32
    return %c0_i32, %c0_i32_0 : i32, i32
  }
  func.func @transform_14(%arg0: i32) -> (i32, i32) {
    %c0_i32 = arith.constant 0 : i32
    %c0_i32_0 = arith.constant 0 : i32
    %c0_i32_1 = arith.constant 0 : i32
    return %c0_i32, %c0_i32_0 : i32, i32
  }
  func.func @transform_15(%arg0: i32) -> (i32, i32, i32) {
    %c0_i32 = arith.constant 0 : i32
    %c0_i32_0 = arith.constant 0 : i32
    %c0_i32_1 = arith.constant 0 : i32
    return %arg0, %c0_i32, %c0_i32_0 : i32, i32, i32
  }
  func.func @transform_16(%arg0: i32) -> (i32, i32, i32, i32) {
    %c0_i32 = arith.constant 0 : i32
    %c0_i32_0 = arith.constant 0 : i32
    %c0_i32_1 = arith.constant 0 : i32
    %c0_i32_2 = arith.constant 0 : i32
    return %arg0, %c0_i32, %c0_i32_0, %c0_i32_1 : i32, i32, i32, i32
  }
}

</mosaic_0001>

<llo_original>
// kernel: tpu_custom_call.1
$region0: #{tpu_custom_call.1}
  #allocation0 [shape = 'u32[]', space=smem, size = 0x4, offset = 0x4, fixed_abs, tag = 'smem constant byte address 0x4 - core index']
  #allocation1 [shape = 'u32[144,128]{1,0:T(1,128)}', space=vmem, size = 0x12000, scoped, tag = 'internal scratch']
  %s0 = inlined_call_operand.vmem [shape: f32[2,16,32], index: 0, kind: input, shape index: {}]
  %s1 = inlined_call_operand.hbm [shape: f32[1,32], index: 1, kind: input, shape index: {}]
  %s2 = inlined_call_operand.hbm [shape: f32[1,32], index: 2, kind: input, shape index: {}]
  %s3 = inlined_call_operand.vmem [shape: bf16[32,96], index: 3, kind: input, shape index: {}]
  %s4 = inlined_call_operand.hbm [shape: f32[1,96], index: 4, kind: input, shape index: {}]
  %s5 = inlined_call_operand.hbm [shape: bf16[32,32], index: 5, kind: input, shape index: {}]
  %s6 = inlined_call_operand.hbm [shape: f32[1,32], index: 6, kind: input, shape index: {}]
  %s7 = inlined_call_operand.hbm [shape: f32[1,32], index: 7, kind: input, shape index: {}]
  %s8 = inlined_call_operand.hbm [shape: f32[1,32], index: 8, kind: input, shape index: {}]
  %s9 = inlined_call_operand.hbm [shape: f32[1,32], index: 9, kind: input, shape index: {}]
  %s10 = inlined_call_operand.vmem [shape: bf16[32,64], index: 10, kind: input, shape index: {}]
  %s11 = inlined_call_operand.vmem [shape: f32[1,64], index: 11, kind: input, shape index: {}]
  %s12 = inlined_call_operand.vmem [shape: bf16[64,32], index: 12, kind: input, shape index: {}]
  %s13 = inlined_call_operand.vmem [shape: f32[1,32], index: 13, kind: input, shape index: {}]
  %s14 = inlined_call_operand.vmem [shape: f32[1,32], index: 14, kind: input, shape index: {}]
  %s15 = inlined_call_operand.hbm [shape: f32[2,16,32], index: 15, kind: output, shape index: {0}]
  %s16 = inlined_call_operand.hbm [shape: f32[2,4,16,16], index: 16, kind: output, shape index: {1}]
  %17 = xla_tuple %s15, %s16
  %s18 = sld [smem:[#allocation0]]
  $region133: #{tpu_custom_call.1} parent=0
    _
  %s20 = ssub.s32 1, %s18
  %s21 = scalar_select 0, %s20, %s18
  $region1: #{tpu_custom_call.1} parent=0
    #allocation2 [shape = 'u8[512]{0}', space=vmem, size = 0x400, scoped, tag = 'input window, operand 1, single buffered']
    #allocation3 [shape = 's32[2]{0}', space=sflag, size = 0x8, scoped, tag = 'scoped memory for tpu_custom_call.1']
    #allocation4 [shape = 's32[2]{0}', space=sflag, size = 0x8, scoped, tag = 'scoped memory for tpu_custom_call.1']
    #allocation5 [shape = 'u8[512]{0}', space=vmem, size = 0x400, scoped, tag = 'input window, operand 2, single buffered']
    #allocation6 [shape = 's32[1]{0}', space=sflag, size = 0x4, scoped, tag = 'scoped memory for tpu_custom_call.1']
    #allocation7 [shape = 'u8[512]{0}', space=vmem, size = 0x400, scoped, tag = 'input window, operand 4, single buffered']
    #allocation8 [shape = 'u8[8192]{0}', space=vmem, size = 0x2000, scoped, tag = 'input window, operand 5, single buffered']
    #allocation9 [shape = 's32[1]{0}', space=sflag, size = 0x4, scoped, tag = 'scoped memory for tpu_custom_call.1']
    #allocation10 [shape = 'u8[512]{0}', space=vmem, size = 0x400, scoped, tag = 'input window, operand 6, single buffered']
    #allocation11 [shape = 'u8[512]{0}', space=vmem, size = 0x400, scoped, tag = 'input window, operand 7, single buffered']
    #allocation12 [shape = 's32[1]{0}', space=sflag, size = 0x4, scoped, tag = 'scoped memory for tpu_custom_call.1']
    #allocation13 [shape = 'u8[512]{0}', space=vmem, size = 0x400, scoped, tag = 'input window, operand 8, single buffered']
    #allocation14 [shape = 'u8[512]{0}', space=vmem, size = 0x400, scoped, tag = 'input window, operand 9, single buffered']
    #allocation15 [shape = 's32[1]{0}', space=sflag, size = 0x4, scoped, tag = 'scoped memory for tpu_custom_call.1']
    #allocation16 [shape = 'u8[16384]{0}', space=vmem, size = 0x4000, scoped, tag = 'output window, operand 0']
    #allocation17 [shape = 'u8[65536]{0}', space=vmem, size = 0x10000, scoped, tag = 'output window, operand 1']
    #allocation18 [shape = 's32[2]{0}', space=sflag, size = 0x8, scoped, tag = 'scoped memory for tpu_custom_call.1']
    %22 = vsyncpa [#allocation3], 0
    %23 = vsyncpa [#allocation6], 0
    %24 = vsyncpa [#allocation9], 0
    %25 = vsyncpa [#allocation12], 0
    %26 = vsyncpa [#allocation15], 0
    %27 = vsyncpa [#allocation4], 0
    %s28 = scalar_lea.sflag [#allocation4], 1
    %29 = vsyncpa %s28, 0
    %30 = vsyncpa [#allocation18], 0
    %s31 = scalar_lea.sflag [#allocation18], 1
    %32 = vsyncpa %s31, 0
    loop: start=0, step=1, limit=4
    $region2: #{tpu_custom_call.1} parent=1 // loop_pre_header
      _
    $region3: #{tpu_custom_call.1} parent=1 // loop_header
      %s34 = sphi 0, %s38
      %p35 = scmp.ge.s32.totalorder %s34, 4
      %s44 = sphi 0, %s46
      %s47 = sphi 0, %s44
      %s48 = sphi 0, %s47
      %s64 = sphi 0, %s48
      %s68 = sphi 0, %s68
      %s70 = sphi 0, %s68
      %s71 = sphi 0, %s70
      %s85 = sphi 0, %s71
      %s89 = sphi 0, %s89
      %s91 = sphi 0, %s89
      %s92 = sphi 0, %s91
      %s106 = sphi 0, %s92
      %s110 = sphi 0, %s110
      %s112 = sphi 0, %s110
      %s113 = sphi 0, %s112
      %s127 = sphi 0, %s113
      %s131 = sphi 0, %s131
      %s133 = sphi 0, %s131
      %s134 = sphi 0, %s133
      %s148 = sphi 0, %s134
      %s152 = sphi 0, %s152
      %s154 = sphi 0, %s152
      %s155 = sphi 0, %s154
      %s169 = sphi 0, %s155
      %s173 = sphi 0, %s173
      %s175 = sphi 0, %s173
      %s176 = sphi 0, %s175
      %s190 = sphi 0, %s176
      %s194 = sphi 0, %s194
      %s196 = sphi 0, %s194
      %s197 = sphi 0, %s196
      %s211 = sphi 0, %s197
      %s215 = sphi 0, %s215
      %s217 = sphi 0, %s215
      %s218 = sphi 0, %s217
      %s232 = sphi 0, %s218
      %s236 = sphi 0, %s236
      %s238 = sphi 0, %s236
      %s239 = sphi 0, %s238
      %s253 = sphi 0, %s239
      %s257 = sphi 0, %s257
      %s259 = sphi 0, %s257
      %s260 = sphi 0, %s259
      %s274 = sphi 0, %s260
      %s278 = sphi 0, %s278
      %s280 = sphi 0, %s278
      %s281 = sphi 0, %s280
      %s295 = sphi 0, %s281
      %s299 = sphi 0, %s299
      %s301 = sphi 0, %s299
      %s302 = sphi 0, %s301
      %s316 = sphi 0, %s302
      %s320 = sphi 0, %s320
      %s322 = sphi 0, %s320
      %s323 = sphi 0, %s322
      %s337 = sphi 0, %s323
      %s341 = sphi 0, %s341
      %s343 = sphi 0, %s341
      %s344 = sphi 0, %s343
      %s358 = sphi 0, %s344
      %s364 = sphi 0, %s366
      %s367 = sphi 0, %s364
      %s368 = sphi 0, %s367
      %s384 = sphi 0, %s368
      %s390 = sphi 0, %s392
      %s393 = sphi 0, %s390
      %s394 = sphi 0, %s393
      %s410 = sphi 0, %s394
    $region4: #{tpu_custom_call.1} parent=1 // loop_header_branch
      %37 = sbr.rel (%p35) target = $region8
    $region5: #{tpu_custom_call.1} parent=1 // loop_body
      %s39 = ssub.s32 %s34, 1
      %s40 = ssub.s32 %s34, 2
      %s41 = sadd.s32 %s34, 1
      %s42 = ssub.s32 %s34, %s41
      %p43 = scmp.eq.s32.totalorder %s42, 0
      %s45 = sadd.s32 %s44, 1
      %s46 = scalar_select %p43, %s44, %s45
      %p49 = pneg %p43
      %p50 = scmp.eq.s32.totalorder %s34, 1
      %p51 = por %p49, %p50
      %p52 = scmp.ne.s32.totalorder %s44, %s47
      %p53 = scmp.eq.s32.totalorder %s34, 0
      %p54 = por %p52, %p53
      %p55 = scmp.ne.s32.totalorder %s44, %s47
      %p56 = scmp.eq.s32.totalorder %s39, 1
      %p57 = por %p55, %p56
      %p58 = scmp.ne.s32.totalorder %s47, %s48
      %p59 = scmp.eq.s32.totalorder %s39, 0
      %p60 = por %p58, %p59
      %p61 = scmp.ne.s32.totalorder %s47, %s48
      %p62 = scmp.eq.s32.totalorder %s40, 1
      %p63 = por %p61, %p62
      %p65 = scmp.ne.s32.totalorder %s48, %s64
      %p66 = scmp.eq.s32.totalorder %s40, 0
      %p67 = por %p65, %p66
      %s69 = sadd.s32 %s68, 1
      %p72 = scmp.eq.s32.totalorder %s34, 1
      %p73 = scmp.ne.s32.totalorder %s68, %s70
      %p74 = scmp.eq.s32.totalorder %s34, 0
      %p75 = por %p73, %p74
      %p76 = scmp.ne.s32.totalorder %s68, %s70
      %p77 = scmp.eq.s32.totalorder %s39, 1
      %p78 = por %p76, %p77
      %p79 = scmp.ne.s32.totalorder %s70, %s71
      %p80 = scmp.eq.s32.totalorder %s39, 0
      %p81 = por %p79, %p80
      %p82 = scmp.ne.s32.totalorder %s70, %s71
      %p83 = scmp.eq.s32.totalorder %s40, 1
      %p84 = por %p82, %p83
      %p86 = scmp.ne.s32.totalorder %s71, %s85
      %p87 = scmp.eq.s32.totalorder %s40, 0
      %p88 = por %p86, %p87
      %s90 = sadd.s32 %s89, 1
      %p93 = scmp.eq.s32.totalorder %s34, 1
      %p94 = scmp.ne.s32.totalorder %s89, %s91
      %p95 = scmp.eq.s32.totalorder %s34, 0
      %p96 = por %p94, %p95
      %p97 = scmp.ne.s32.totalorder %s89, %s91
      %p98 = scmp.eq.s32.totalorder %s39, 1
      %p99 = por %p97, %p98
      %p100 = scmp.ne.s32.totalorder %s91, %s92
      %p101 = scmp.eq.s32.totalorder %s39, 0
      %p102 = por %p100, %p101
      %p103 = scmp.ne.s32.totalorder %s91, %s92
      %p104 = scmp.eq.s32.totalorder %s40, 1
      %p105 = por %p103, %p104
      %p107 = scmp.ne.s32.totalorder %s92, %s106
      %p108 = scmp.eq.s32.totalorder %s40, 0
      %p109 = por %p107, %p108
      %s111 = sadd.s32 %s110, 1
      %p114 = scmp.eq.s32.totalorder %s34, 1
      %p115 = scmp.ne.s32.totalorder %s110, %s112
      %p116 = scmp.eq.s32.totalorder %s34, 0
      %p117 = por %p115, %p116
      %p118 = scmp.ne.s32.totalorder %s110, %s112
      %p119 = scmp.eq.s32.totalorder %s39, 1
      %p120 = por %p118, %p119
      %p121 = scmp.ne.s32.totalorder %s112, %s113
      %p122 = scmp.eq.s32.totalorder %s39, 0
      %p123 = por %p121, %p122
      %p124 = scmp.ne.s32.totalorder %s112, %s113
      %p125 = scmp.eq.s32.totalorder %s40, 1
      %p126 = por %p124, %p125
      %p128 = scmp.ne.s32.totalorder %s113, %s127
      %p129 = scmp.eq.s32.totalorder %s40, 0
      %p130 = por %p128, %p129
      %s132 = sadd.s32 %s131, 1
      %p135 = scmp.eq.s32.totalorder %s34, 1
      %p136 = scmp.ne.s32.totalorder %s131, %s133
      %p137 = scmp.eq.s32.totalorder %s34, 0
      %p138 = por %p136, %p137
      %p139 = scmp.ne.s32.totalorder %s131, %s133
      %p140 = scmp.eq.s32.totalorder %s39, 1
      %p141 = por %p139, %p140
      %p142 = scmp.ne.s32.totalorder %s133, %s134
      %p143 = scmp.eq.s32.totalorder %s39, 0
      %p144 = por %p142, %p143
      %p145 = scmp.ne.s32.totalorder %s133, %s134
      %p146 = scmp.eq.s32.totalorder %s40, 1
      %p147 = por %p145, %p146
      %p149 = scmp.ne.s32.totalorder %s134, %s148
      %p150 = scmp.eq.s32.totalorder %s40, 0
      %p151 = por %p149, %p150
      %s153 = sadd.s32 %s152, 1
      %p156 = scmp.eq.s32.totalorder %s34, 1
      %p157 = scmp.ne.s32.totalorder %s152, %s154
      %p158 = scmp.eq.s32.totalorder %s34, 0
      %p159 = por %p157, %p158
      %p160 = scmp.ne.s32.totalorder %s152, %s154
      %p161 = scmp.eq.s32.totalorder %s39, 1
      %p162 = por %p160, %p161
      %p163 = scmp.ne.s32.totalorder %s154, %s155
      %p164 = scmp.eq.s32.totalorder %s39, 0
      %p165 = por %p163, %p164
      %p166 = scmp.ne.s32.totalorder %s154, %s155
      %p167 = scmp.eq.s32.totalorder %s40, 1
      %p168 = por %p166, %p167
      %p170 = scmp.ne.s32.totalorder %s155, %s169
      %p171 = scmp.eq.s32.totalorder %s40, 0
      %p172 = por %p170, %p171
      %s174 = sadd.s32 %s173, 1
      %p177 = scmp.eq.s32.totalorder %s34, 1
      %p178 = scmp.ne.s32.totalorder %s173, %s175
      %p179 = scmp.eq.s32.totalorder %s34, 0
      %p180 = por %p178, %p179
      %p181 = scmp.ne.s32.totalorder %s173, %s175
      %p182 = scmp.eq.s32.totalorder %s39, 1
      %p183 = por %p181, %p182
      %p184 = scmp.ne.s32.totalorder %s175, %s176
      %p185 = scmp.eq.s32.totalorder %s39, 0
      %p186 = por %p184, %p185
      %p187 = scmp.ne.s32.totalorder %s175, %s176
      %p188 = scmp.eq.s32.totalorder %s40, 1
      %p189 = por %p187, %p188
      %p191 = scmp.ne.s32.totalorder %s176, %s190
      %p192 = scmp.eq.s32.totalorder %s40, 0
      %p193 = por %p191, %p192
      %s195 = sadd.s32 %s194, 1
      %p198 = scmp.eq.s32.totalorder %s34, 1
      %p199 = scmp.ne.s32.totalorder %s194, %s196
      %p200 = scmp.eq.s32.totalorder %s34, 0
      %p201 = por %p199, %p200
      %p202 = scmp.ne.s32.totalorder %s194, %s196
      %p203 = scmp.eq.s32.totalorder %s39, 1
      %p204 = por %p202, %p203
      %p205 = scmp.ne.s32.totalorder %s196, %s197
      %p206 = scmp.eq.s32.totalorder %s39, 0
      %p207 = por %p205, %p206
      %p208 = scmp.ne.s32.totalorder %s196, %s197
      %p209 = scmp.eq.s32.totalorder %s40, 1
      %p210 = por %p208, %p209
      %p212 = scmp.ne.s32.totalorder %s197, %s211
      %p213 = scmp.eq.s32.totalorder %s40, 0
      %p214 = por %p212, %p213
      %s216 = sadd.s32 %s215, 1
      %p219 = scmp.eq.s32.totalorder %s34, 1
      %p220 = scmp.ne.s32.totalorder %s215, %s217
      %p221 = scmp.eq.s32.totalorder %s34, 0
      %p222 = por %p220, %p221
      %p223 = scmp.ne.s32.totalorder %s215, %s217
      %p224 = scmp.eq.s32.totalorder %s39, 1
      %p225 = por %p223, %p224
      %p226 = scmp.ne.s32.totalorder %s217, %s218
      %p227 = scmp.eq.s32.totalorder %s39, 0
      %p228 = por %p226, %p227
      %p229 = scmp.ne.s32.totalorder %s217, %s218
      %p230 = scmp.eq.s32.totalorder %s40, 1
      %p231 = por %p229, %p230
      %p233 = scmp.ne.s32.totalorder %s218, %s232
      %p234 = scmp.eq.s32.totalorder %s40, 0
      %p235 = por %p233, %p234
      %s237 = sadd.s32 %s236, 1
      %p240 = scmp.eq.s32.totalorder %s34, 1
      %p241 = scmp.ne.s32.totalorder %s236, %s238
      %p242 = scmp.eq.s32.totalorder %s34, 0
      %p243 = por %p241, %p242
      %p244 = scmp.ne.s32.totalorder %s236, %s238
      %p245 = scmp.eq.s32.totalorder %s39, 1
      %p246 = por %p244, %p245
      %p247 = scmp.ne.s32.totalorder %s238, %s239
      %p248 = scmp.eq.s32.totalorder %s39, 0
      %p249 = por %p247, %p248
      %p250 = scmp.ne.s32.totalorder %s238, %s239
      %p251 = scmp.eq.s32.totalorder %s40, 1
      %p252 = por %p250, %p251
      %p254 = scmp.ne.s32.totalorder %s239, %s253
      %p255 = scmp.eq.s32.totalorder %s40, 0
      %p256 = por %p254, %p255
      %s258 = sadd.s32 %s257, 1
      %p261 = scmp.eq.s32.totalorder %s34, 1
      %p262 = scmp.ne.s32.totalorder %s257, %s259
      %p263 = scmp.eq.s32.totalorder %s34, 0
      %p264 = por %p262, %p263
      %p265 = scmp.ne.s32.totalorder %s257, %s259
      %p266 = scmp.eq.s32.totalorder %s39, 1
      %p267 = por %p265, %p266
      %p268 = scmp.ne.s32.totalorder %s259, %s260
      %p269 = scmp.eq.s32.totalorder %s39, 0
      %p270 = por %p268, %p269
      %p271 = scmp.ne.s32.totalorder %s259, %s260
      %p272 = scmp.eq.s32.totalorder %s40, 1
      %p273 = por %p271, %p272
      %p275 = scmp.ne.s32.totalorder %s260, %s274
      %p276 = scmp.eq.s32.totalorder %s40, 0
      %p277 = por %p275, %p276
      %s279 = sadd.s32 %s278, 1
      %p282 = scmp.eq.s32.totalorder %s34, 1
      %p283 = scmp.ne.s32.totalorder %s278, %s280
      %p284 = scmp.eq.s32.totalorder %s34, 0
      %p285 = por %p283, %p284
      %p286 = scmp.ne.s32.totalorder %s278, %s280
      %p287 = scmp.eq.s32.totalorder %s39, 1
      %p288 = por %p286, %p287
      %p289 = scmp.ne.s32.totalorder %s280, %s281
      %p290 = scmp.eq.s32.totalorder %s39, 0
      %p291 = por %p289, %p290
      %p292 = scmp.ne.s32.totalorder %s280, %s281
      %p293 = scmp.eq.s32.totalorder %s40, 1
      %p294 = por %p292, %p293
      %p296 = scmp.ne.s32.totalorder %s281, %s295
      %p297 = scmp.eq.s32.totalorder %s40, 0
      %p298 = por %p296, %p297
      %s300 = sadd.s32 %s299, 1
      %p303 = scmp.eq.s32.totalorder %s34, 1
      %p304 = scmp.ne.s32.totalorder %s299, %s301
      %p305 = scmp.eq.s32.totalorder %s34, 0
      %p306 = por %p304, %p305
      %p307 = scmp.ne.s32.totalorder %s299, %s301
      %p308 = scmp.eq.s32.totalorder %s39, 1
      %p309 = por %p307, %p308
      %p310 = scmp.ne.s32.totalorder %s301, %s302
      %p311 = scmp.eq.s32.totalorder %s39, 0
      %p312 = por %p310, %p311
      %p313 = scmp.ne.s32.totalorder %s301, %s302
      %p314 = scmp.eq.s32.totalorder %s40, 1
      %p315 = por %p313, %p314
      %p317 = scmp.ne.s32.totalorder %s302, %s316
      %p318 = scmp.eq.s32.totalorder %s40, 0
      %p319 = por %p317, %p318
      %s321 = sadd.s32 %s320, 1
      %p324 = scmp.eq.s32.totalorder %s34, 1
      %p325 = scmp.ne.s32.totalorder %s320, %s322
      %p326 = scmp.eq.s32.totalorder %s34, 0
      %p327 = por %p325, %p326
      %p328 = scmp.ne.s32.totalorder %s320, %s322
      %p329 = scmp.eq.s32.totalorder %s39, 1
      %p330 = por %p328, %p329
      %p331 = scmp.ne.s32.totalorder %s322, %s323
      %p332 = scmp.eq.s32.totalorder %s39, 0
      %p333 = por %p331, %p332
      %p334 = scmp.ne.s32.totalorder %s322, %s323
      %p335 = scmp.eq.s32.totalorder %s40, 1
      %p336 = por %p334, %p335
      %p338 = scmp.ne.s32.totalorder %s323, %s337
      %p339 = scmp.eq.s32.totalorder %s40, 0
      %p340 = por %p338, %p339
      %s342 = sadd.s32 %s341, 1
      %p345 = scmp.eq.s32.totalorder %s34, 1
      %p346 = scmp.ne.s32.totalorder %s341, %s343
      %p347 = scmp.eq.s32.totalorder %s34, 0
      %p348 = por %p346, %p347
      %p349 = scmp.ne.s32.totalorder %s341, %s343
      %p350 = scmp.eq.s32.totalorder %s39, 1
      %p351 = por %p349, %p350
      %p352 = scmp.ne.s32.totalorder %s343, %s344
      %p353 = scmp.eq.s32.totalorder %s39, 0
      %p354 = por %p352, %p353
      %p355 = scmp.ne.s32.totalorder %s343, %s344
      %p356 = scmp.eq.s32.totalorder %s40, 1
      %p357 = por %p355, %p356
      %p359 = scmp.ne.s32.totalorder %s344, %s358
      %p360 = scmp.eq.s32.totalorder %s40, 0
      %p361 = por %p359, %p360
      %s362 = ssub.s32 %s34, %s41
      %p363 = scmp.eq.s32.totalorder %s362, 0
      %s365 = sadd.s32 %s364, 1
      %s366 = scalar_select %p363, %s364, %s365
      %p369 = pneg %p363
      %p370 = scmp.eq.s32.totalorder %s34, 1
      %p371 = por %p369, %p370
      %p372 = scmp.ne.s32.totalorder %s364, %s367
      %p373 = scmp.eq.s32.totalorder %s34, 0
      %p374 = por %p372, %p373
      %p375 = scmp.ne.s32.totalorder %s364, %s367
      %p376 = scmp.eq.s32.totalorder %s39, 1
      %p377 = por %p375, %p376
      %p378 = scmp.ne.s32.totalorder %s367, %s368
      %p379 = scmp.eq.s32.totalorder %s39, 0
      %p380 = por %p378, %p379
      %p381 = scmp.ne.s32.totalorder %s367, %s368
      %p382 = scmp.eq.s32.totalorder %s40, 1
      %p383 = por %p381, %p382
      %p385 = scmp.ne.s32.totalorder %s368, %s384
      %p386 = scmp.eq.s32.totalorder %s40, 0
      %p387 = por %p385, %p386
      %s388 = ssub.s32 %s34, %s41
      %p389 = scmp.eq.s32.totalorder %s388, 0
      %s391 = sadd.s32 %s390, 1
      %s392 = scalar_select %p389, %s390, %s391
      %p395 = pneg %p389
      %p396 = scmp.eq.s32.totalorder %s34, 1
      %p397 = por %p395, %p396
      %p398 = scmp.ne.s32.totalorder %s390, %s393
      %p399 = scmp.eq.s32.totalorder %s34, 0
      %p400 = por %p398, %p399
      %p401 = scmp.ne.s32.totalorder %s390, %s393
      %p402 = scmp.eq.s32.totalorder %s39, 1
      %p403 = por %p401, %p402
      %p404 = scmp.ne.s32.totalorder %s393, %s394
      %p405 = scmp.eq.s32.totalorder %s39, 0
      %p406 = por %p404, %p405
      %p407 = scmp.ne.s32.totalorder %s393, %s394
      %p408 = scmp.eq.s32.totalorder %s40, 1
      %p409 = por %p407, %p408
      %p411 = scmp.ne.s32.totalorder %s394, %s410
      %p412 = scmp.eq.s32.totalorder %s40, 0
      %p413 = por %p411, %p412
      %p414 = scmp.le.s32.totalorder 1, %s34
      %p415 = scmp.lt.s32.totalorder %s34, 3
      %p416 = pnand %p414, %p415
      %p417 = pneg %p416
      // Predicated region
      $region9: #{tpu_custom_call.1} parent=5 // pred_check
        _
      $region10: #{tpu_custom_call.1} parent=5 // pred_check_branch
        %419 = sbr.rel (%p416) target = $region12
      $region11: #{tpu_custom_call.1} parent=5 // pred_region
        %s420 = ssub.s32 %s34, 1
        // Predicated region
        $region13: #{tpu_custom_call.1} parent=11 // pred_check
          %p421 = pneg %p81
        $region14: #{tpu_custom_call.1} parent=11 // pred_check_branch
          %423 = sbr.rel (%p421) target = $region16
        $region15: #{tpu_custom_call.1} parent=11 // pred_region
          %s425 = ssub.s32 16, 16
          %426 = vsyncadd [#allocation3], %s425
          %s428 = sshll.u32 [#allocation2], 4
          %s429 = int_to_ptr.vmem [resolvable:$true] %s428
          %431 = dma.hbm_to_vmem [thread:$0]  %s1, 16, %s429, [#allocation3]
        $region16: #{tpu_custom_call.1} parent=11 // pred_fallthru
          _
        // Predicated region
        $region17: #{tpu_custom_call.1} parent=11 // pred_check
          %p432 = pneg %p102
        $region18: #{tpu_custom_call.1} parent=11 // pred_check_branch
          %434 = sbr.rel (%p432) target = $region20
        $region19: #{tpu_custom_call.1} parent=11 // pred_region
          %s436 = ssub.s32 16, 16
          %437 = vsyncadd [#allocation6], %s436
          %s439 = sshll.u32 [#allocation5], 4
          %s440 = int_to_ptr.vmem [resolvable:$true] %s439
          %442 = dma.hbm_to_vmem [thread:$0]  %s2, 16, %s440, [#allocation6]
        $region20: #{tpu_custom_call.1} parent=11 // pred_fallthru
          _
        // Predicated region
        $region21: #{tpu_custom_call.1} parent=11 // pred_check
          %p443 = pneg %p123
        $region22: #{tpu_custom_call.1} parent=11 // pred_check_branch
          %445 = sbr.rel (%p443) target = $region24
        $region23: #{tpu_custom_call.1} parent=11 // pred_region
          _
        $region24: #{tpu_custom_call.1} parent=11 // pred_fallthru
          _
        // Predicated region
        $region25: #{tpu_custom_call.1} parent=11 // pred_check
          %p446 = pneg %p144
        $region26: #{tpu_custom_call.1} parent=11 // pred_check_branch
          %448 = sbr.rel (%p446) target = $region28
        $region27: #{tpu_custom_call.1} parent=11 // pred_region
          %s450 = ssub.s32 16, 16
          %451 = vsyncadd [#allocation6], %s450
          %s453 = sshll.u32 [#allocation7], 4
          %s454 = int_to_ptr.vmem [resolvable:$true] %s453
          %456 = dma.hbm_to_vmem [thread:$0]  %s4, 16, %s454, [#allocation6]
        $region28: #{tpu_custom_call.1} parent=11 // pred_fallthru
          _
        // Predicated region
        $region29: #{tpu_custom_call.1} parent=11 // pred_check
          %p457 = pneg %p165
        $region30: #{tpu_custom_call.1} parent=11 // pred_check_branch
          %459 = sbr.rel (%p457) target = $region32
        $region31: #{tpu_custom_call.1} parent=11 // pred_region
          %s461 = ssub.s32 256, 256
          %462 = vsyncadd [#allocation9], %s461
          %s463 = sshll.u32 [#allocation8], 4
          %s464 = int_to_ptr.vmem [resolvable:$true] %s463
          %469 = dma.hbm_to_vmem [thread:$0]  %s5, 256, %s464, [#allocation9], 64, 64, 4
        $region32: #{tpu_custom_call.1} parent=11 // pred_fallthru
          _
        // Predicated region
        $region33: #{tpu_custom_call.1} parent=11 // pred_check
          %p470 = pneg %p186
        $region34: #{tpu_custom_call.1} parent=11 // pred_check_branch
          %472 = sbr.rel (%p470) target = $region36
        $region35: #{tpu_custom_call.1} parent=11 // pred_region
          %s474 = ssub.s32 16, 16
          %475 = vsyncadd [#allocation9], %s474
          %s477 = sshll.u32 [#allocation10], 4
          %s478 = int_to_ptr.vmem [resolvable:$true] %s477
          %480 = dma.hbm_to_vmem [thread:$0]  %s6, 16, %s478, [#allocation9]
        $region36: #{tpu_custom_call.1} parent=11 // pred_fallthru
          _
        // Predicated region
        $region37: #{tpu_custom_call.1} parent=11 // pred_check
          %p481 = pneg %p207
        $region38: #{tpu_custom_call.1} parent=11 // pred_check_branch
          %483 = sbr.rel (%p481) target = $region40
        $region39: #{tpu_custom_call.1} parent=11 // pred_region
          %s485 = ssub.s32 16, 16
          %486 = vsyncadd [#allocation12], %s485
          %s488 = sshll.u32 [#allocation11], 4
          %s489 = int_to_ptr.vmem [resolvable:$true] %s488
          %491 = dma.hbm_to_vmem [thread:$0]  %s7, 16, %s489, [#allocation12]
        $region40: #{tpu_custom_call.1} parent=11 // pred_fallthru
          _
        // Predicated region
        $region41: #{tpu_custom_call.1} parent=11 // pred_check
          %p492 = pneg %p228
        $region42: #{tpu_custom_call.1} parent=11 // pred_check_branch
          %494 = sbr.rel (%p492) target = $region44
        $region43: #{tpu_custom_call.1} parent=11 // pred_region
          %s496 = ssub.s32 16, 16
          %497 = vsyncadd [#allocation12], %s496
          %s499 = sshll.u32 [#allocation13], 4
          %s500 = int_to_ptr.vmem [resolvable:$true] %s499
          %502 = dma.hbm_to_vmem [thread:$0]  %s8, 16, %s500, [#allocation12]
        $region44: #{tpu_custom_call.1} parent=11 // pred_fallthru
          _
        // Predicated region
        $region45: #{tpu_custom_call.1} parent=11 // pred_check
          %p503 = pneg %p249
        $region46: #{tpu_custom_call.1} parent=11 // pred_check_branch
          %505 = sbr.rel (%p503) target = $region48
        $region47: #{tpu_custom_call.1} parent=11 // pred_region
          %s507 = ssub.s32 16, 16
          %508 = vsyncadd [#allocation15], %s507
          %s510 = sshll.u32 [#allocation14], 4
          %s511 = int_to_ptr.vmem [resolvable:$true] %s510
          %513 = dma.hbm_to_vmem [thread:$0]  %s9, 16, %s511, [#allocation15]
        $region48: #{tpu_custom_call.1} parent=11 // pred_fallthru
          _
        // Predicated region
        $region49: #{tpu_custom_call.1} parent=11 // pred_check
          %p514 = pneg %p270
        $region50: #{tpu_custom_call.1} parent=11 // pred_check_branch
          %516 = sbr.rel (%p514) target = $region52
        $region51: #{tpu_custom_call.1} parent=11 // pred_region
          _
        $region52: #{tpu_custom_call.1} parent=11 // pred_fallthru
          _
        // Predicated region
        $region53: #{tpu_custom_call.1} parent=11 // pred_check
          %p517 = pneg %p291
        $region54: #{tpu_custom_call.1} parent=11 // pred_check_branch
          %519 = sbr.rel (%p517) target = $region56
        $region55: #{tpu_custom_call.1} parent=11 // pred_region
          _
        $region56: #{tpu_custom_call.1} parent=11 // pred_fallthru
          _
        // Predicated region
        $region57: #{tpu_custom_call.1} parent=11 // pred_check
          %p520 = pneg %p312
        $region58: #{tpu_custom_call.1} parent=11 // pred_check_branch
          %522 = sbr.rel (%p520) target = $region60
        $region59: #{tpu_custom_call.1} parent=11 // pred_region
          _
        $region60: #{tpu_custom_call.1} parent=11 // pred_fallthru
          _
        // Predicated region
        $region61: #{tpu_custom_call.1} parent=11 // pred_check
          %p523 = pneg %p333
        $region62: #{tpu_custom_call.1} parent=11 // pred_check_branch
          %525 = sbr.rel (%p523) target = $region64
        $region63: #{tpu_custom_call.1} parent=11 // pred_region
          _
        $region64: #{tpu_custom_call.1} parent=11 // pred_fallthru
          _
        // Predicated region
        $region65: #{tpu_custom_call.1} parent=11 // pred_check
          %p526 = pneg %p354
        $region66: #{tpu_custom_call.1} parent=11 // pred_check_branch
          %528 = sbr.rel (%p526) target = $region68
        $region67: #{tpu_custom_call.1} parent=11 // pred_region
          _
        $region68: #{tpu_custom_call.1} parent=11 // pred_fallthru
          _
      $region12: #{tpu_custom_call.1} parent=5 // pred_fallthru
        _
      %p529 = scmp.lt.s32.totalorder %s34, 2
      // Predicated region
      $region69: #{tpu_custom_call.1} parent=5 // pred_check
        %p530 = pneg %p529
      $region70: #{tpu_custom_call.1} parent=5 // pred_check_branch
        %532 = sbr.rel (%p530) target = $region72
      $region71: #{tpu_custom_call.1} parent=5 // pred_region
        // Predicated region
        $region73: #{tpu_custom_call.1} parent=71 // pred_check
          %p533 = pneg %p54
        $region74: #{tpu_custom_call.1} parent=71 // pred_check_branch
          %535 = sbr.rel (%p533) target = $region76
        $region75: #{tpu_custom_call.1} parent=71 // pred_region
          %p536 = scmp.lt.s32.totalorder %s34, 1
          %s537 = scalar_select %p536, %s34, 1
          %s538 = smul.addr %s537, 2
          %s539 = smul.addr %s538, 8
          %s540 = scalar_lea.vmem %s0, %s539
        $region76: #{tpu_custom_call.1} parent=71 // pred_fallthru
          _
      $region72: #{tpu_custom_call.1} parent=5 // pred_fallthru
        _
      %p541 = scmp.le.s32.totalorder 1, %s34
      %p542 = scmp.lt.s32.totalorder %s34, 3
      %p543 = pnand %p541, %p542
      %p544 = pneg %p543
      // Predicated region
      $region77: #{tpu_custom_call.1} parent=5 // pred_check
        _
      $region78: #{tpu_custom_call.1} parent=5 // pred_check_branch
        %546 = sbr.rel (%p543) target = $region80
      $region79: #{tpu_custom_call.1} parent=5 // pred_region
        %s547 = ssub.s32 %s34, 1
        // Predicated region
        $region81: #{tpu_custom_call.1} parent=79 // pred_check
          %p548 = pneg %p81
        $region82: #{tpu_custom_call.1} parent=79 // pred_check_branch
          %550 = sbr.rel (%p548) target = $region84
        $region83: #{tpu_custom_call.1} parent=79 // pred_region
          %551 = dma.done [#allocation3], 16
        $region84: #{tpu_custom_call.1} parent=79 // pred_fallthru
          _
        // Predicated region
        $region85: #{tpu_custom_call.1} parent=79 // pred_check
          %p552 = pneg %p102
        $region86: #{tpu_custom_call.1} parent=79 // pred_check_branch
          %554 = sbr.rel (%p552) target = $region88
        $region87: #{tpu_custom_call.1} parent=79 // pred_region
          %555 = dma.done [#allocation6], 16
        $region88: #{tpu_custom_call.1} parent=79 // pred_fallthru
          _
        // Predicated region
        $region89: #{tpu_custom_call.1} parent=79 // pred_check
          %p556 = pneg %p144
        $region90: #{tpu_custom_call.1} parent=79 // pred_check_branch
          %558 = sbr.rel (%p556) target = $region92
        $region91: #{tpu_custom_call.1} parent=79 // pred_region
          %559 = dma.done [#allocation6], 16
        $region92: #{tpu_custom_call.1} parent=79 // pred_fallthru
          _
        // Predicated region
        $region93: #{tpu_custom_call.1} parent=79 // pred_check
          %p560 = pneg %p165
        $region94: #{tpu_custom_call.1} parent=79 // pred_check_branch
          %562 = sbr.rel (%p560) target = $region96
        $region95: #{tpu_custom_call.1} parent=79 // pred_region
          %563 = dma.done [#allocation9], 256
        $region96: #{tpu_custom_call.1} parent=79 // pred_fallthru
          _
        // Predicated region
        $region97: #{tpu_custom_call.1} parent=79 // pred_check
          %p564 = pneg %p186
        $region98: #{tpu_custom_call.1} parent=79 // pred_check_branch
          %566 = sbr.rel (%p564) target = $region100
        $region99: #{tpu_custom_call.1} parent=79 // pred_region
          %567 = dma.done [#allocation9], 16
        $region100: #{tpu_custom_call.1} parent=79 // pred_fallthru
          _
        // Predicated region
        $region101: #{tpu_custom_call.1} parent=79 // pred_check
          %p568 = pneg %p207
        $region102: #{tpu_custom_call.1} parent=79 // pred_check_branch
          %570 = sbr.rel (%p568) target = $region104
        $region103: #{tpu_custom_call.1} parent=79 // pred_region
          %571 = dma.done [#allocation12], 16
        $region104: #{tpu_custom_call.1} parent=79 // pred_fallthru
          _
        // Predicated region
        $region105: #{tpu_custom_call.1} parent=79 // pred_check
          %p572 = pneg %p228
        $region106: #{tpu_custom_call.1} parent=79 // pred_check_branch
          %574 = sbr.rel (%p572) target = $region108
        $region107: #{tpu_custom_call.1} parent=79 // pred_region
          %575 = dma.done [#allocation12], 16
        $region108: #{tpu_custom_call.1} parent=79 // pred_fallthru
          _
        // Predicated region
        $region109: #{tpu_custom_call.1} parent=79 // pred_check
          %p576 = pneg %p249
        $region110: #{tpu_custom_call.1} parent=79 // pred_check_branch
          %578 = sbr.rel (%p576) target = $region112
        $region111: #{tpu_custom_call.1} parent=79 // pred_region
          %579 = dma.done [#allocation15], 16
        $region112: #{tpu_custom_call.1} parent=79 // pred_fallthru
          _
        %p580 = scmp.lt.s32.totalorder %s39, 1
        %s581 = scalar_select %p580, %s39, 1
        %s582 = smul.addr %s581, 2
        %s583 = smul.addr %s582, 8
        %s584 = scalar_lea.vmem %s0, %s583
        %p585 = pneg %p60
        %p586 = pneg %p57
        %p587 = pneg %p81
        %p588 = pneg %p78
        %p589 = pneg %p102
        %p590 = pneg %p99
        %p591 = pneg %p123
        %p592 = pneg %p120
        %p593 = pneg %p144
        %p594 = pneg %p141
        %p595 = pneg %p165
        %p596 = pneg %p162
        %p597 = pneg %p186
        %p598 = pneg %p183
        %p599 = pneg %p207
        %p600 = pneg %p204
        %p601 = pneg %p228
        %p602 = pneg %p225
        %p603 = pneg %p249
        %p604 = pneg %p246
        %p605 = pneg %p270
        %p606 = pneg %p267
        %p607 = pneg %p291
        %p608 = pneg %p288
        %p609 = pneg %p312
        %p610 = pneg %p309
        %p611 = pneg %p333
        %p612 = pneg %p330
        %p613 = pneg %p354
        %p614 = pneg %p351
        %p615 = pneg %p380
        %p616 = pneg %p377
        %s617 = sand.u32 %s367, 1
        %s618 = scalar_lea.sflag [#allocation4], %s617
        %s619 = sand.u32 %s367, 1
        %s620 = smul.addr %s619, 16
        %s621 = scalar_lea.vmem [#allocation16], %s620
        %p622 = pneg %p406
        %p623 = pneg %p403
        %s624 = sand.u32 %s393, 1
        %s625 = scalar_lea.sflag [#allocation18], %s624
        %s626 = sand.u32 %s393, 1
        %s627 = smul.addr %s626, 64
        %s628 = scalar_lea.vmem [#allocation17], %s627
        %p629 = scmp.lt.s32.totalorder %s39, 1
        %s630 = scalar_select %p629, %s39, 1
        %s631 = smul.addr %s630, 2
        %s632 = smul.addr %s631, 8
        %s633 = scalar_lea.vmem %s0, %s632
        %v635 = vld [vmem:[%s633] sm:$0xff]
        %v636 = vld [vmem:[%s633 + $0x8] sm:$0xff]
        %v637 = vld [vmem:[#allocation2] sm:$0x1]
        %v638 = vld [vmem:[#allocation5] sm:$0x1]
        %vm639 = vcmask 261120
        %v640 = vsel %vm639, %v635, 0.0
        %641 = vadd.xlane.f32.xlu0 %v640
        %v642 = vpop.xlane.xlu0 %641
        %v643 = vsel %vm639, %v636, 0.0
        %644 = vadd.xlane.f32.xlu0 %v643
        %v645 = vpop.xlane.xlu0 %644
        %v646 = vrcp.pop 32.0
        %v647 = vmul.f32 %v642, %v646
        %v648 = vmul.f32 %v645, %v646
        %v649 = vsub.f32 %v635, %v647
        %v650 = vsub.f32 %v636, %v648
        %v651 = vmul.f32 %v649, %v649
        %v652 = vmul.f32 %v650, %v650
        %v653 = vsel %vm639, %v651, 0.0
        %654 = vadd.xlane.f32.xlu0 %v653
        %v655 = vpop.xlane.xlu0 %654
        %v656 = vsel %vm639, %v652, 0.0
        %657 = vadd.xlane.f32.xlu0 %v656
        %v658 = vpop.xlane.xlu0 %657
        %v659 = vmul.f32 %v655, %v646
        %v660 = vmul.f32 %v658, %v646
        %v661 = vadd.f32 %v659, 1e-06
        %v662 = vadd.f32 %v660, 1e-06
        %v663 = vrsqrt.pop %v661
        %v664 = vrsqrt.pop %v662
        %v665 = vmul.f32 %v649, %v663
        %v666 = vmul.f32 %v650, %v664
        %v668 = vlaneseq
        %v669 = vshrl.u32 %v668, 7
        %v670 = vsub.s32 0, %v669
        %v671 = vrot.slane %v637, %v670
        %v673 = vmul.f32 %v665, %v671
        %v674 = vmul.f32 %v666, %v671
        %v676 = vlaneseq
        %v677 = vshrl.u32 %v676, 7
        %v678 = vsub.s32 0, %v677
        %v679 = vrot.slane %v638, %v678
        %v681 = vadd.f32 %v673, %v679
        %v682 = vadd.f32 %v674, %v679
        %v683 = vpack.c.bf16 %v682, %v681
        %v684 = vld [vmem:[%s3] sm:$0xf]
        %v685 = vld [vmem:[%s3 + $0x4] sm:$0xf]
        %v686 = vld [vmem:[%s3 + $0x8] sm:$0xf]
        %v687 = vld [vmem:[%s3 + $0xc] sm:$0xf]
        %v688 = vld [vmem:[#allocation7] sm:$0x1]
        %v690 = vlaneseq
        %v691 = vshrl.u32 %v690, 7
        %v692 = vsub.s32 0, %v691
        %v693 = vrot.slane %v688, %v692
        %v699 = vunpack.c.l.b16 %v684
        %v700 = vunpack.c.l.b16 %v685
        %v701 = vunpack.c.l.b16 %v686
        %v702 = vunpack.c.l.b16 %v687
        %v703 = vpack.c.b16 %v700, %v699
        %v704 = vpack.c.b16 %v702, %v701
        %v708 = vsel %vm639, %v683, 0
        %710 = vmatprep.subr.bf16.mxu0 0
        %711 = vmatpush1.bf16.msra.mxu0 0
        %712 = vmatprep.subr.bf16.mxu0 0
        %713 = vmatpush1.bf16.msra.mxu0 0
        %714 = vmatprep.subr.bf16.mxu0 0
        %715 = vmatpush1.bf16.msra.mxu0 0
        %716 = vmatprep.subr.bf16.mxu0 0
        %717 = vmatpush1.bf16.msra.mxu0 0
        %718 = vmatprep.subr.bf16.mxu0 0
        %719 = vmatpush1.bf16.msra.mxu0 0
        %720 = vmatprep.subr.bf16.mxu0 0
        %721 = vmatpush1.bf16.msra.mxu0 0
        %722 = vmatprep.subr.bf16.mxu0 0
        %723 = vmatpush1.bf16.msra.mxu0 %v704
        %724 = vmatprep.subr.bf16.mxu0 0
        %725 = vmatpush1.bf16.msra.mxu0 %v703
        %726 = vmatprep.subr.bf16.mxu0 0
        %727 = vmatpush2.bf16.msra.mxu0 0
        %728 = vmatprep.subr.bf16.mxu0 0
        %729 = vmatpush2.bf16.msra.mxu0 0
        %730 = vmatprep.subr.bf16.mxu0 0
        %731 = vmatpush2.bf16.msra.mxu0 0
        %732 = vmatprep.subr.bf16.mxu0 0
        %733 = vmatpush2.bf16.msra.mxu0 0
        %734 = vmatprep.subr.bf16.mxu0 0
        %735 = vmatpush2.bf16.msra.mxu0 0
        %736 = vmatprep.subr.bf16.mxu0 0
        %737 = vmatpush2.bf16.msra.mxu0 0
        %738 = vmatprep.subr.bf16.mxu0 0
        %739 = vmatpush2.bf16.msra.mxu0 0
        %740 = vmatprep.subr.bf16.mxu0 0
        %741 = vmatpush2.bf16.msra.mxu0 0
        %742 = vmatprep.mubr.bf16.mxu0 0
        %743 = vmatmul.mubr.bf16.gmra.mxu0 %v708
        %v744 = vpop.f32.mrf.mxu0
        %v745 = vadd.f32 %v693, %v744
        %v746 = vpop.f32.mrf.mxu0
        %v747 = vpop.f32.mrf.mxu0
        %v748 = vadd.f32 %v693, %v747
        %v749 = vpop.f32.mrf.mxu0
        %750 = vdwg.mxu0
        %v751 = vpack.c.bf16 %v748, %v745
        %753 = vrot.lane.b32.xlu0 %v751, 96
        %v754 = vpop.permute.xlu0 %753
        %vm755 = vcmask 64512
        %v757 = vsel %vm755, %v751, 0
        %v760 = vsel %vm755, %v754, 0
        %762 = vmatprep.subr.bf16.mxu0 0
        %763 = vmatpush1.bf16.xpose.msra.mxu0 0
        %764 = vmatprep.subr.bf16.mxu0 0
        %765 = vmatpush1.bf16.xpose.msra.mxu0 0
        %766 = vmatprep.subr.bf16.mxu0 0
        %767 = vmatpush1.bf16.xpose.msra.mxu0 0
        %768 = vmatprep.subr.bf16.mxu0 0
        %769 = vmatpush1.bf16.xpose.msra.mxu0 0
        %770 = vmatprep.subr.bf16.mxu0 0
        %771 = vmatpush1.bf16.xpose.msra.mxu0 0
        %772 = vmatprep.subr.bf16.mxu0 0
        %773 = vmatpush1.bf16.xpose.msra.mxu0 0
        %774 = vmatprep.subr.bf16.mxu0 0
        %775 = vmatpush1.bf16.xpose.msra.mxu0 0
        %776 = vmatprep.subr.bf16.mxu0 0
        %777 = vmatpush1.bf16.xpose.msra.mxu0 %v760
        %778 = vmatprep.subr.bf16.mxu0 0
        %779 = vmatpush2.bf16.xpose.msra.mxu0 0
        %780 = vmatprep.subr.bf16.mxu0 0
        %781 = vmatpush2.bf16.xpose.msra.mxu0 0
        %782 = vmatprep.subr.bf16.mxu0 0
        %783 = vmatpush2.bf16.xpose.msra.mxu0 0
        %784 = vmatprep.subr.bf16.mxu0 0
        %785 = vmatpush2.bf16.xpose.msra.mxu0 0
        %786 = vmatprep.subr.bf16.mxu0 0
        %787 = vmatpush2.bf16.xpose.msra.mxu0 0
        %788 = vmatprep.subr.bf16.mxu0 0
        %789 = vmatpush2.bf16.xpose.msra.mxu0 0
        %790 = vmatprep.subr.bf16.mxu0 0
        %791 = vmatpush2.bf16.xpose.msra.mxu0 0
        %792 = vmatprep.subr.bf16.mxu0 0
        %793 = vmatpush2.bf16.xpose.msra.mxu0 0
        %794 = vmatprep.mubr.bf16.mxu0 0
        %795 = vmatmul.mubr.bf16.gmra.mxu0 %v757
        %v796 = vpop.f32.mrf.mxu0
        %v797 = vadd.f32 0.0, %v796
        %v798 = vpop.f32.mrf.mxu0
        %v799 = vpop.f32.mrf.mxu0
        %v800 = vadd.f32 0.0, %v799
        %v801 = vpop.f32.mrf.mxu0
        %802 = vdwg.mxu0
        %v803 = vmul.f32 %v797, 0.35355338
        %v804 = vmul.f32 %v800, 0.35355338
        %vm805 = vcmask 130048
        %v806 = vsel %vm805, %v803, -inf
        %807 = vmax.xlane.f32.xlu0 %v806
        %v808 = vpop.xlane.xlu0 %807
        %v809 = vsel %vm805, %v804, -inf
        %810 = vmax.xlane.f32.xlu0 %v809
        %v811 = vpop.xlane.xlu0 %810
        %v812 = vsub.f32 %v803, %v808
        %v813 = vsub.f32 %v804, %v811
        %v814 = vmul.f32 %v812, 1.442695
        %v815 = vpow.pop %v814
        %v816 = vmul.f32 %v813, 1.442695
        %v817 = vpow.pop %v816
        %v818 = vsel %vm805, %v815, 0.0
        %819 = vadd.xlane.f32.xlu0 %v818
        %v820 = vpop.xlane.xlu0 %819
        %v821 = vsel %vm805, %v817, 0.0
        %822 = vadd.xlane.f32.xlu0 %v821
        %v823 = vpop.xlane.xlu0 %822
        %v824 = vrcp.pop %v820
        %v825 = vrcp.pop %v823
        %v826 = vmul.f32 %v815, %v824
        %v827 = vmul.f32 %v817, %v825
        %828 = vst.msk [vmem:[%s628] sm:$0xff] %vm805, %v826
        %829 = vst.msk [vmem:[%s628 + $0x8] sm:$0xff] %vm805, %v827
        %v830 = vpack.c.bf16 %v827, %v826
        %831 = vrot.lane.b32.xlu0 %v751, 64
        %v832 = vpop.permute.xlu0 %831
        %v835 = vsel %vm805, %v830, 0
        %837 = vmatprep.subr.bf16.mxu0 0
        %838 = vmatpush1.bf16.msra.mxu0 0
        %839 = vmatprep.subr.bf16.mxu0 0
        %840 = vmatpush1.bf16.msra.mxu0 0
        %841 = vmatprep.subr.bf16.mxu0 0
        %842 = vmatpush1.bf16.msra.mxu0 0
        %843 = vmatprep.subr.bf16.mxu0 0
        %844 = vmatpush1.bf16.msra.mxu0 0
        %845 = vmatprep.subr.bf16.mxu0 0
        %846 = vmatpush1.bf16.msra.mxu0 0
        %847 = vmatprep.subr.bf16.mxu0 0
        %848 = vmatpush1.bf16.msra.mxu0 0
        %849 = vmatprep.subr.bf16.mxu0 0
        %850 = vmatpush1.bf16.msra.mxu0 0
        %851 = vmatprep.subr.bf16.mxu0 0
        %852 = vmatpush1.bf16.msra.mxu0 %v832
        %853 = vmatprep.subr.bf16.mxu0 0
        %854 = vmatpush2.bf16.msra.mxu0 0
        %855 = vmatprep.subr.bf16.mxu0 0
        %856 = vmatpush2.bf16.msra.mxu0 0
        %857 = vmatprep.subr.bf16.mxu0 0
        %858 = vmatpush2.bf16.msra.mxu0 0
        %859 = vmatprep.subr.bf16.mxu0 0
        %860 = vmatpush2.bf16.msra.mxu0 0
        %861 = vmatprep.subr.bf16.mxu0 0
        %862 = vmatpush2.bf16.msra.mxu0 0
        %863 = vmatprep.subr.bf16.mxu0 0
        %864 = vmatpush2.bf16.msra.mxu0 0
        %865 = vmatprep.subr.bf16.mxu0 0
        %866 = vmatpush2.bf16.msra.mxu0 0
        %867 = vmatprep.subr.bf16.mxu0 0
        %868 = vmatpush2.bf16.msra.mxu0 0
        %869 = vmatprep.mubr.bf16.mxu0 0
        %870 = vmatmul.mubr.bf16.gmra.mxu0 %v835
        %v871 = vpop.f32.mrf.mxu0
        %v872 = vadd.f32 0.0, %v871
        %v873 = vpop.f32.mrf.mxu0
        %v874 = vpop.f32.mrf.mxu0
        %v875 = vadd.f32 0.0, %v874
        %v876 = vpop.f32.mrf.mxu0
        %877 = vdwg.mxu0
        %878 = vrot.lane.b32.xlu0 %v751, 120
        %v879 = vpop.permute.xlu0 %878
        %880 = vrot.lane.b32.xlu0 %v751, 88
        %v881 = vpop.permute.xlu0 %880
        %v883 = vsel %vm755, %v879, 0
        %v886 = vsel %vm755, %v881, 0
        %888 = vmatprep.subr.bf16.mxu0 0
        %889 = vmatpush1.bf16.xpose.msra.mxu0 0
        %890 = vmatprep.subr.bf16.mxu0 0
        %891 = vmatpush1.bf16.xpose.msra.mxu0 0
        %892 = vmatprep.subr.bf16.mxu0 0
        %893 = vmatpush1.bf16.xpose.msra.mxu0 0
        %894 = vmatprep.subr.bf16.mxu0 0
        %895 = vmatpush1.bf16.xpose.msra.mxu0 0
        %896 = vmatprep.subr.bf16.mxu0 0
        %897 = vmatpush1.bf16.xpose.msra.mxu0 0
        %898 = vmatprep.subr.bf16.mxu0 0
        %899 = vmatpush1.bf16.xpose.msra.mxu0 0
        %900 = vmatprep.subr.bf16.mxu0 0
        %901 = vmatpush1.bf16.xpose.msra.mxu0 0
        %902 = vmatprep.subr.bf16.mxu0 0
        %903 = vmatpush1.bf16.xpose.msra.mxu0 %v886
        %904 = vmatprep.subr.bf16.mxu0 0
        %905 = vmatpush2.bf16.xpose.msra.mxu0 0
        %906 = vmatprep.subr.bf16.mxu0 0
        %907 = vmatpush2.bf16.xpose.msra.mxu0 0
        %908 = vmatprep.subr.bf16.mxu0 0
        %909 = vmatpush2.bf16.xpose.msra.mxu0 0
        %910 = vmatprep.subr.bf16.mxu0 0
        %911 = vmatpush2.bf16.xpose.msra.mxu0 0
        %912 = vmatprep.subr.bf16.mxu0 0
        %913 = vmatpush2.bf16.xpose.msra.mxu0 0
        %914 = vmatprep.subr.bf16.mxu0 0
        %915 = vmatpush2.bf16.xpose.msra.mxu0 0
        %916 = vmatprep.subr.bf16.mxu0 0
        %917 = vmatpush2.bf16.xpose.msra.mxu0 0
        %918 = vmatprep.subr.bf16.mxu0 0
        %919 = vmatpush2.bf16.xpose.msra.mxu0 0
        %920 = vmatprep.mubr.bf16.mxu0 0
        %921 = vmatmul.mubr.bf16.gmra.mxu0 %v883
        %v922 = vpop.f32.mrf.mxu0
        %v923 = vadd.f32 0.0, %v922
        %v924 = vpop.f32.mrf.mxu0
        %v925 = vpop.f32.mrf.mxu0
        %v926 = vadd.f32 0.0, %v925
        %v927 = vpop.f32.mrf.mxu0
        %928 = vdwg.mxu0
        %v929 = vmul.f32 %v923, 0.35355338
        %v930 = vmul.f32 %v926, 0.35355338
        %v931 = vsel %vm805, %v929, -inf
        %932 = vmax.xlane.f32.xlu0 %v931
        %v933 = vpop.xlane.xlu0 %932
        %v934 = vsel %vm805, %v930, -inf
        %935 = vmax.xlane.f32.xlu0 %v934
        %v936 = vpop.xlane.xlu0 %935
        %v937 = vsub.f32 %v929, %v933
        %v938 = vsub.f32 %v930, %v936
        %v939 = vmul.f32 %v937, 1.442695
        %v940 = vpow.pop %v939
        %v941 = vmul.f32 %v938, 1.442695
        %v942 = vpow.pop %v941
        %v943 = vsel %vm805, %v940, 0.0
        %944 = vadd.xlane.f32.xlu0 %v943
        %v945 = vpop.xlane.xlu0 %944
        %v946 = vsel %vm805, %v942, 0.0
        %947 = vadd.xlane.f32.xlu0 %v946
        %v948 = vpop.xlane.xlu0 %947
        %v949 = vrcp.pop %v945
        %v950 = vrcp.pop %v948
        %v951 = vmul.f32 %v940, %v949
        %v952 = vmul.f32 %v942, %v950
        %s953 = scalar_lea.vmem %s628, 16 [#allocation17]
        %954 = vst.msk [vmem:[%s953] sm:$0xff] %vm805, %v951
        %955 = vst.msk [vmem:[%s953 + $0x8] sm:$0xff] %vm805, %v952
        %v956 = vpack.c.bf16 %v952, %v951
        %957 = vrot.lane.b32.xlu0 %v751, 56
        %v958 = vpop.permute.xlu0 %957
        %v961 = vsel %vm805, %v956, 0
        %963 = vmatprep.subr.bf16.mxu0 0
        %964 = vmatpush1.bf16.msra.mxu0 0
        %965 = vmatprep.subr.bf16.mxu0 0
        %966 = vmatpush1.bf16.msra.mxu0 0
        %967 = vmatprep.subr.bf16.mxu0 0
        %968 = vmatpush1.bf16.msra.mxu0 0
        %969 = vmatprep.subr.bf16.mxu0 0
        %970 = vmatpush1.bf16.msra.mxu0 0
        %971 = vmatprep.subr.bf16.mxu0 0
        %972 = vmatpush1.bf16.msra.mxu0 0
        %973 = vmatprep.subr.bf16.mxu0 0
        %974 = vmatpush1.bf16.msra.mxu0 0
        %975 = vmatprep.subr.bf16.mxu0 0
        %976 = vmatpush1.bf16.msra.mxu0 0
        %977 = vmatprep.subr.bf16.mxu0 0
        %978 = vmatpush1.bf16.msra.mxu0 %v958
        %979 = vmatprep.subr.bf16.mxu0 0
        %980 = vmatpush2.bf16.msra.mxu0 0
        %981 = vmatprep.subr.bf16.mxu0 0
        %982 = vmatpush2.bf16.msra.mxu0 0
        %983 = vmatprep.subr.bf16.mxu0 0
        %984 = vmatpush2.bf16.msra.mxu0 0
        %985 = vmatprep.subr.bf16.mxu0 0
        %986 = vmatpush2.bf16.msra.mxu0 0
        %987 = vmatprep.subr.bf16.mxu0 0
        %988 = vmatpush2.bf16.msra.mxu0 0
        %989 = vmatprep.subr.bf16.mxu0 0
        %990 = vmatpush2.bf16.msra.mxu0 0
        %991 = vmatprep.subr.bf16.mxu0 0
        %992 = vmatpush2.bf16.msra.mxu0 0
        %993 = vmatprep.subr.bf16.mxu0 0
        %994 = vmatpush2.bf16.msra.mxu0 0
        %995 = vmatprep.mubr.bf16.mxu0 0
        %996 = vmatmul.mubr.bf16.gmra.mxu0 %v961
        %v997 = vpop.f32.mrf.mxu0
        %v998 = vadd.f32 0.0, %v997
        %v999 = vpop.f32.mrf.mxu0
        %v1000 = vpop.f32.mrf.mxu0
        %v1001 = vadd.f32 0.0, %v1000
        %v1002 = vpop.f32.mrf.mxu0
        %1003 = vdwg.mxu0
        %1004 = vrot.lane.b32.xlu0 %v751, 112
        %v1005 = vpop.permute.xlu0 %1004
        %1006 = vrot.lane.b32.xlu0 %v751, 80
        %v1007 = vpop.permute.xlu0 %1006
        %v1009 = vsel %vm755, %v1005, 0
        %v1012 = vsel %vm755, %v1007, 0
        %1014 = vmatprep.subr.bf16.mxu0 0
        %1015 = vmatpush1.bf16.xpose.msra.mxu0 0
        %1016 = vmatprep.subr.bf16.mxu0 0
        %1017 = vmatpush1.bf16.xpose.msra.mxu0 0
        %1018 = vmatprep.subr.bf16.mxu0 0
        %1019 = vmatpush1.bf16.xpose.msra.mxu0 0
        %1020 = vmatprep.subr.bf16.mxu0 0
        %1021 = vmatpush1.bf16.xpose.msra.mxu0 0
        %1022 = vmatprep.subr.bf16.mxu0 0
        %1023 = vmatpush1.bf16.xpose.msra.mxu0 0
        %1024 = vmatprep.subr.bf16.mxu0 0
        %1025 = vmatpush1.bf16.xpose.msra.mxu0 0
        %1026 = vmatprep.subr.bf16.mxu0 0
        %1027 = vmatpush1.bf16.xpose.msra.mxu0 0
        %1028 = vmatprep.subr.bf16.mxu0 0
        %1029 = vmatpush1.bf16.xpose.msra.mxu0 %v1012
        %1030 = vmatprep.subr.bf16.mxu0 0
        %1031 = vmatpush2.bf16.xpose.msra.mxu0 0
        %1032 = vmatprep.subr.bf16.mxu0 0
        %1033 = vmatpush2.bf16.xpose.msra.mxu0 0
        %1034 = vmatprep.subr.bf16.mxu0 0
        %1035 = vmatpush2.bf16.xpose.msra.mxu0 0
        %1036 = vmatprep.subr.bf16.mxu0 0
        %1037 = vmatpush2.bf16.xpose.msra.mxu0 0
        %1038 = vmatprep.subr.bf16.mxu0 0
        %1039 = vmatpush2.bf16.xpose.msra.mxu0 0
        %1040 = vmatprep.subr.bf16.mxu0 0
        %1041 = vmatpush2.bf16.xpose.msra.mxu0 0
        %1042 = vmatprep.subr.bf16.mxu0 0
        %1043 = vmatpush2.bf16.xpose.msra.mxu0 0
        %1044 = vmatprep.subr.bf16.mxu0 0
        %1045 = vmatpush2.bf16.xpose.msra.mxu0 0
        %1046 = vmatprep.mubr.bf16.mxu0 0
        %1047 = vmatmul.mubr.bf16.gmra.mxu0 %v1009
        %v1048 = vpop.f32.mrf.mxu0
        %v1049 = vadd.f32 0.0, %v1048
        %v1050 = vpop.f32.mrf.mxu0
        %v1051 = vpop.f32.mrf.mxu0
        %v1052 = vadd.f32 0.0, %v1051
        %v1053 = vpop.f32.mrf.mxu0
        %1054 = vdwg.mxu0
        %v1055 = vmul.f32 %v1049, 0.35355338
        %v1056 = vmul.f32 %v1052, 0.35355338
        %v1057 = vsel %vm805, %v1055, -inf
        %1058 = vmax.xlane.f32.xlu0 %v1057
        %v1059 = vpop.xlane.xlu0 %1058
        %v1060 = vsel %vm805, %v1056, -inf
        %1061 = vmax.xlane.f32.xlu0 %v1060
        %v1062 = vpop.xlane.xlu0 %1061
        %v1063 = vsub.f32 %v1055, %v1059
        %v1064 = vsub.f32 %v1056, %v1062
        %v1065 = vmul.f32 %v1063, 1.442695
        %v1066 = vpow.pop %v1065
        %v1067 = vmul.f32 %v1064, 1.442695
        %v1068 = vpow.pop %v1067
        %v1069 = vsel %vm805, %v1066, 0.0
        %1070 = vadd.xlane.f32.xlu0 %v1069
        %v1071 = vpop.xlane.xlu0 %1070
        %v1072 = vsel %vm805, %v1068, 0.0
        %1073 = vadd.xlane.f32.xlu0 %v1072
        %v1074 = vpop.xlane.xlu0 %1073
        %v1075 = vrcp.pop %v1071
        %v1076 = vrcp.pop %v1074
        %v1077 = vmul.f32 %v1066, %v1075
        %v1078 = vmul.f32 %v1068, %v1076
        %s1079 = scalar_lea.vmem %s628, 32 [#allocation17]
        %1080 = vst.msk [vmem:[%s1079] sm:$0xff] %vm805, %v1077
        %1081 = vst.msk [vmem:[%s1079 + $0x8] sm:$0xff] %vm805, %v1078
        %v1082 = vpack.c.bf16 %v1078, %v1077
        %1083 = vrot.lane.b32.xlu0 %v751, 48
        %v1084 = vpop.permute.xlu0 %1083
        %v1087 = vsel %vm805, %v1082, 0
        %1089 = vmatprep.subr.bf16.mxu0 0
        %1090 = vmatpush1.bf16.msra.mxu0 0
        %1091 = vmatprep.subr.bf16.mxu0 0
        %1092 = vmatpush1.bf16.msra.mxu0 0
        %1093 = vmatprep.subr.bf16.mxu0 0
        %1094 = vmatpush1.bf16.msra.mxu0 0
        %1095 = vmatprep.subr.bf16.mxu0 0
        %1096 = vmatpush1.bf16.msra.mxu0 0
        %1097 = vmatprep.subr.bf16.mxu0 0
        %1098 = vmatpush1.bf16.msra.mxu0 0
        %1099 = vmatprep.subr.bf16.mxu0 0
        %1100 = vmatpush1.bf16.msra.mxu0 0
        %1101 = vmatprep.subr.bf16.mxu0 0
        %1102 = vmatpush1.bf16.msra.mxu0 0
        %1103 = vmatprep.subr.bf16.mxu0 0
        %1104 = vmatpush1.bf16.msra.mxu0 %v1084
        %1105 = vmatprep.subr.bf16.mxu0 0
        %1106 = vmatpush2.bf16.msra.mxu0 0
        %1107 = vmatprep.subr.bf16.mxu0 0
        %1108 = vmatpush2.bf16.msra.mxu0 0
        %1109 = vmatprep.subr.bf16.mxu0 0
        %1110 = vmatpush2.bf16.msra.mxu0 0
        %1111 = vmatprep.subr.bf16.mxu0 0
        %1112 = vmatpush2.bf16.msra.mxu0 0
        %1113 = vmatprep.subr.bf16.mxu0 0
        %1114 = vmatpush2.bf16.msra.mxu0 0
        %1115 = vmatprep.subr.bf16.mxu0 0
        %1116 = vmatpush2.bf16.msra.mxu0 0
        %1117 = vmatprep.subr.bf16.mxu0 0
        %1118 = vmatpush2.bf16.msra.mxu0 0
        %1119 = vmatprep.subr.bf16.mxu0 0
        %1120 = vmatpush2.bf16.msra.mxu0 0
        %1121 = vmatprep.mubr.bf16.mxu0 0
        %1122 = vmatmul.mubr.bf16.gmra.mxu0 %v1087
        %v1123 = vpop.f32.mrf.mxu0
        %v1124 = vadd.f32 0.0, %v1123
        %v1125 = vpop.f32.mrf.mxu0
        %v1126 = vpop.f32.mrf.mxu0
        %v1127 = vadd.f32 0.0, %v1126
        %v1128 = vpop.f32.mrf.mxu0
        %1129 = vdwg.mxu0
        %1130 = vrot.lane.b32.xlu0 %v751, 104
        %v1131 = vpop.permute.xlu0 %1130
        %1132 = vrot.lane.b32.xlu0 %v751, 72
        %v1133 = vpop.permute.xlu0 %1132
        %v1135 = vsel %vm755, %v1131, 0
        %v1138 = vsel %vm755, %v1133, 0
        %1140 = vmatprep.subr.bf16.mxu0 0
        %1141 = vmatpush1.bf16.xpose.msra.mxu0 0
        %1142 = vmatprep.subr.bf16.mxu0 0
        %1143 = vmatpush1.bf16.xpose.msra.mxu0 0
        %1144 = vmatprep.subr.bf16.mxu0 0
        %1145 = vmatpush1.bf16.xpose.msra.mxu0 0
        %1146 = vmatprep.subr.bf16.mxu0 0
        %1147 = vmatpush1.bf16.xpose.msra.mxu0 0
        %1148 = vmatprep.subr.bf16.mxu0 0
        %1149 = vmatpush1.bf16.xpose.msra.mxu0 0
        %1150 = vmatprep.subr.bf16.mxu0 0
        %1151 = vmatpush1.bf16.xpose.msra.mxu0 0
        %1152 = vmatprep.subr.bf16.mxu0 0
        %1153 = vmatpush1.bf16.xpose.msra.mxu0 0
        %1154 = vmatprep.subr.bf16.mxu0 0
        %1155 = vmatpush1.bf16.xpose.msra.mxu0 %v1138
        %1156 = vmatprep.subr.bf16.mxu0 0
        %1157 = vmatpush2.bf16.xpose.msra.mxu0 0
        %1158 = vmatprep.subr.bf16.mxu0 0
        %1159 = vmatpush2.bf16.xpose.msra.mxu0 0
        %1160 = vmatprep.subr.bf16.mxu0 0
        %1161 = vmatpush2.bf16.xpose.msra.mxu0 0
        %1162 = vmatprep.subr.bf16.mxu0 0
        %1163 = vmatpush2.bf16.xpose.msra.mxu0 0
        %1164 = vmatprep.subr.bf16.mxu0 0
        %1165 = vmatpush2.bf16.xpose.msra.mxu0 0
        %1166 = vmatprep.subr.bf16.mxu0 0
        %1167 = vmatpush2.bf16.xpose.msra.mxu0 0
        %1168 = vmatprep.subr.bf16.mxu0 0
        %1169 = vmatpush2.bf16.xpose.msra.mxu0 0
        %1170 = vmatprep.subr.bf16.mxu0 0
        %1171 = vmatpush2.bf16.xpose.msra.mxu0 0
        %1172 = vmatprep.mubr.bf16.mxu0 0
        %1173 = vmatmul.mubr.bf16.gmra.mxu0 %v1135
        %v1174 = vpop.f32.mrf.mxu0
        %v1175 = vadd.f32 0.0, %v1174
        %v1176 = vpop.f32.mrf.mxu0
        %v1177 = vpop.f32.mrf.mxu0
        %v1178 = vadd.f32 0.0, %v1177
        %v1179 = vpop.f32.mrf.mxu0
        %1180 = vdwg.mxu0
        %v1181 = vmul.f32 %v1175, 0.35355338
        %v1182 = vmul.f32 %v1178, 0.35355338
        %v1183 = vsel %vm805, %v1181, -inf
        %1184 = vmax.xlane.f32.xlu0 %v1183
        %v1185 = vpop.xlane.xlu0 %1184
        %v1186 = vsel %vm805, %v1182, -inf
        %1187 = vmax.xlane.f32.xlu0 %v1186
        %v1188 = vpop.xlane.xlu0 %1187
        %v1189 = vsub.f32 %v1181, %v1185
        %v1190 = vsub.f32 %v1182, %v1188
        %v1191 = vmul.f32 %v1189, 1.442695
        %v1192 = vpow.pop %v1191
        %v1193 = vmul.f32 %v1190, 1.442695
        %v1194 = vpow.pop %v1193
        %v1195 = vsel %vm805, %v1192, 0.0
        %1196 = vadd.xlane.f32.xlu0 %v1195
        %v1197 = vpop.xlane.xlu0 %1196
        %v1198 = vsel %vm805, %v1194, 0.0
        %1199 = vadd.xlane.f32.xlu0 %v1198
        %v1200 = vpop.xlane.xlu0 %1199
        %v1201 = vrcp.pop %v1197
        %v1202 = vrcp.pop %v1200
        %v1203 = vmul.f32 %v1192, %v1201
        %v1204 = vmul.f32 %v1194, %v1202
        %s1205 = scalar_lea.vmem %s628, 48 [#allocation17]
        %1206 = vst.msk [vmem:[%s1205] sm:$0xff] %vm805, %v1203
        %1207 = vst.msk [vmem:[%s1205 + $0x8] sm:$0xff] %vm805, %v1204
        %v1208 = vpack.c.bf16 %v1204, %v1203
        %1209 = vrot.lane.b32.xlu0 %v751, 40
        %v1210 = vpop.permute.xlu0 %1209
        %v1213 = vsel %vm805, %v1208, 0
        %1215 = vmatprep.subr.bf16.mxu0 0
        %1216 = vmatpush1.bf16.msra.mxu0 0
        %1217 = vmatprep.subr.bf16.mxu0 0
        %1218 = vmatpush1.bf16.msra.mxu0 0
        %1219 = vmatprep.subr.bf16.mxu0 0
        %1220 = vmatpush1.bf16.msra.mxu0 0
        %1221 = vmatprep.subr.bf16.mxu0 0
        %1222 = vmatpush1.bf16.msra.mxu0 0
        %1223 = vmatprep.subr.bf16.mxu0 0
        %1224 = vmatpush1.bf16.msra.mxu0 0
        %1225 = vmatprep.subr.bf16.mxu0 0
        %1226 = vmatpush1.bf16.msra.mxu0 0
        %1227 = vmatprep.subr.bf16.mxu0 0
        %1228 = vmatpush1.bf16.msra.mxu0 0
        %1229 = vmatprep.subr.bf16.mxu0 0
        %1230 = vmatpush1.bf16.msra.mxu0 %v1210
        %1231 = vmatprep.subr.bf16.mxu0 0
        %1232 = vmatpush2.bf16.msra.mxu0 0
        %1233 = vmatprep.subr.bf16.mxu0 0
        %1234 = vmatpush2.bf16.msra.mxu0 0
        %1235 = vmatprep.subr.bf16.mxu0 0
        %1236 = vmatpush2.bf16.msra.mxu0 0
        %1237 = vmatprep.subr.bf16.mxu0 0
        %1238 = vmatpush2.bf16.msra.mxu0 0
        %1239 = vmatprep.subr.bf16.mxu0 0
        %1240 = vmatpush2.bf16.msra.mxu0 0
        %1241 = vmatprep.subr.bf16.mxu0 0
        %1242 = vmatpush2.bf16.msra.mxu0 0
        %1243 = vmatprep.subr.bf16.mxu0 0
        %1244 = vmatpush2.bf16.msra.mxu0 0
        %1245 = vmatprep.subr.bf16.mxu0 0
        %1246 = vmatpush2.bf16.msra.mxu0 0
        %1247 = vmatprep.mubr.bf16.mxu0 0
        %1248 = vmatmul.mubr.bf16.gmra.mxu0 %v1213
        %v1249 = vpop.f32.mrf.mxu0
        %v1250 = vadd.f32 0.0, %v1249
        %v1251 = vpop.f32.mrf.mxu0
        %v1252 = vpop.f32.mrf.mxu0
        %v1253 = vadd.f32 0.0, %v1252
        %v1254 = vpop.f32.mrf.mxu0
        %1255 = vdwg.mxu0
        %1258 = vrot.lane.b32.xlu0 %v998, 8
        %v1259 = vpop.permute.xlu0 %1258
        %1260 = vrot.lane.b32.xlu0 %v1001, 8
        %v1261 = vpop.permute.xlu0 %1260
        %1266 = vrot.lane.b32.xlu0 %v1124, 16
        %v1267 = vpop.permute.xlu0 %1266
        %1268 = vrot.lane.b32.xlu0 %v1127, 16
        %v1269 = vpop.permute.xlu0 %1268
        %1274 = vrot.lane.b32.xlu0 %v1250, 24
        %v1275 = vpop.permute.xlu0 %1274
        %1276 = vrot.lane.b32.xlu0 %v1253, 24
        %v1277 = vpop.permute.xlu0 %1276
        %v1280 = vsel %vm755, %v872, %v1259
        %v1281 = vsel %vm755, %v875, %v1261
        %v1282 = vsel %vm805, %v1280, %v1267
        %v1283 = vsel %vm805, %v1281, %v1269
        %vm1284 = vcmask 195584
        %v1285 = vsel %vm1284, %v1282, %v1275
        %v1286 = vsel %vm1284, %v1283, %v1277
        %v1287 = vpack.c.bf16 %v1286, %v1285
        %v1288 = vld [vmem:[#allocation8] sm:$0xf]
        %v1289 = vld [vmem:[#allocation8 + $0x4] sm:$0xf]
        %v1290 = vld [vmem:[#allocation8 + $0x8] sm:$0xf]
        %v1291 = vld [vmem:[#allocation8 + $0xc] sm:$0xf]
        %v1292 = vld [vmem:[#allocation10] sm:$0x1]
        %v1294 = vlaneseq
        %v1295 = vshrl.u32 %v1294, 7
        %v1296 = vsub.s32 0, %v1295
        %v1297 = vrot.slane %v1292, %v1296
        %v1303 = vunpack.c.l.b16 %v1288
        %v1304 = vunpack.c.l.b16 %v1289
        %v1305 = vunpack.c.l.b16 %v1290
        %v1306 = vunpack.c.l.b16 %v1291
        %v1307 = vpack.c.b16 %v1304, %v1303
        %v1308 = vpack.c.b16 %v1306, %v1305
        %v1312 = vsel %vm639, %v1287, 0
        %1314 = vmatprep.subr.bf16.mxu0 0
        %1315 = vmatpush1.bf16.msra.mxu0 0
        %1316 = vmatprep.subr.bf16.mxu0 0
        %1317 = vmatpush1.bf16.msra.mxu0 0
        %1318 = vmatprep.subr.bf16.mxu0 0
        %1319 = vmatpush1.bf16.msra.mxu0 0
        %1320 = vmatprep.subr.bf16.mxu0 0
        %1321 = vmatpush1.bf16.msra.mxu0 0
        %1322 = vmatprep.subr.bf16.mxu0 0
        %1323 = vmatpush1.bf16.msra.mxu0 0
        %1324 = vmatprep.subr.bf16.mxu0 0
        %1325 = vmatpush1.bf16.msra.mxu0 0
        %1326 = vmatprep.subr.bf16.mxu0 0
        %1327 = vmatpush1.bf16.msra.mxu0 %v1308
        %1328 = vmatprep.subr.bf16.mxu0 0
        %1329 = vmatpush1.bf16.msra.mxu0 %v1307
        %1330 = vmatprep.subr.bf16.mxu0 0
        %1331 = vmatpush2.bf16.msra.mxu0 0
        %1332 = vmatprep.subr.bf16.mxu0 0
        %1333 = vmatpush2.bf16.msra.mxu0 0
        %1334 = vmatprep.subr.bf16.mxu0 0
        %1335 = vmatpush2.bf16.msra.mxu0 0
        %1336 = vmatprep.subr.bf16.mxu0 0
        %1337 = vmatpush2.bf16.msra.mxu0 0
        %1338 = vmatprep.subr.bf16.mxu0 0
        %1339 = vmatpush2.bf16.msra.mxu0 0
        %1340 = vmatprep.subr.bf16.mxu0 0
        %1341 = vmatpush2.bf16.msra.mxu0 0
        %1342 = vmatprep.subr.bf16.mxu0 0
        %1343 = vmatpush2.bf16.msra.mxu0 0
        %1344 = vmatprep.subr.bf16.mxu0 0
        %1345 = vmatpush2.bf16.msra.mxu0 0
        %1346 = vmatprep.mubr.bf16.mxu0 0
        %1347 = vmatmul.mubr.bf16.gmra.mxu0 %v1312
        %v1348 = vpop.f32.mrf.mxu0
        %v1349 = vadd.f32 %v1297, %v1348
        %v1350 = vpop.f32.mrf.mxu0
        %v1351 = vpop.f32.mrf.mxu0
        %v1352 = vadd.f32 %v1297, %v1351
        %v1353 = vpop.f32.mrf.mxu0
        %1354 = vdwg.mxu0
        %v1355 = vld [vmem:[#allocation11] sm:$0x1]
        %v1357 = vlaneseq
        %v1358 = vshrl.u32 %v1357, 7
        %v1359 = vsub.s32 0, %v1358
        %v1360 = vrot.slane %v1355, %v1359
        %v1362 = vmul.f32 %v1360, %v1349
        %v1363 = vmul.f32 %v1360, %v1352
        %v1364 = vadd.f32 %v635, %v1362
        %v1365 = vadd.f32 %v636, %v1363
        %v1366 = vld [vmem:[#allocation13] sm:$0x1]
        %v1367 = vld [vmem:[#allocation14] sm:$0x1]
        %v1368 = vsel %vm639, %v1364, 0.0
        %1369 = vadd.xlane.f32.xlu0 %v1368
        %v1370 = vpop.xlane.xlu0 %1369
        %v1371 = vsel %vm639, %v1365, 0.0
        %1372 = vadd.xlane.f32.xlu0 %v1371
        %v1373 = vpop.xlane.xlu0 %1372
        %v1374 = vmul.f32 %v1370, %v646
        %v1375 = vmul.f32 %v1373, %v646
        %v1376 = vsub.f32 %v1364, %v1374
        %v1377 = vsub.f32 %v1365, %v1375
        %v1378 = vmul.f32 %v1376, %v1376
        %v1379 = vmul.f32 %v1377, %v1377
        %v1380 = vsel %vm639, %v1378, 0.0
        %1381 = vadd.xlane.f32.xlu0 %v1380
        %v1382 = vpop.xlane.xlu0 %1381
        %v1383 = vsel %vm639, %v1379, 0.0
        %1384 = vadd.xlane.f32.xlu0 %v1383
        %v1385 = vpop.xlane.xlu0 %1384
        %v1386 = vmul.f32 %v1382, %v646
        %v1387 = vmul.f32 %v1385, %v646
        %v1388 = vadd.f32 %v1386, 1e-06
        %v1389 = vadd.f32 %v1387, 1e-06
        %v1390 = vrsqrt.pop %v1388
        %v1391 = vrsqrt.pop %v1389
        %v1392 = vmul.f32 %v1376, %v1390
        %v1393 = vmul.f32 %v1377, %v1391
        %v1395 = vlaneseq
        %v1396 = vshrl.u32 %v1395, 7
        %v1397 = vsub.s32 0, %v1396
        %v1398 = vrot.slane %v1366, %v1397
        %v1400 = vmul.f32 %v1392, %v1398
        %v1401 = vmul.f32 %v1393, %v1398
        %v1403 = vlaneseq
        %v1404 = vshrl.u32 %v1403, 7
        %v1405 = vsub.s32 0, %v1404
        %v1406 = vrot.slane %v1367, %v1405
        %v1408 = vadd.f32 %v1400, %v1406
        %v1409 = vadd.f32 %v1401, %v1406
        %v1410 = vpack.c.bf16 %v1409, %v1408
        %v1411 = vld [vmem:[%s10] sm:$0xf]
        %v1412 = vld [vmem:[%s10 + $0x4] sm:$0xf]
        %v1413 = vld [vmem:[%s10 + $0x8] sm:$0xf]
        %v1414 = vld [vmem:[%s10 + $0xc] sm:$0xf]
        %v1415 = vld [vmem:[%s11] sm:$0x1]
        %v1417 = vlaneseq
        %v1418 = vshrl.u32 %v1417, 7
        %v1419 = vsub.s32 0, %v1418
        %v1420 = vrot.slane %v1415, %v1419
        %v1426 = vunpack.c.l.b16 %v1411
        %v1427 = vunpack.c.l.b16 %v1412
        %v1428 = vunpack.c.l.b16 %v1413
        %v1429 = vunpack.c.l.b16 %v1414
        %v1430 = vpack.c.b16 %v1427, %v1426
        %v1431 = vpack.c.b16 %v1429, %v1428
        %v1435 = vsel %vm639, %v1410, 0
        %1437 = vmatprep.subr.bf16.mxu0 0
        %1438 = vmatpush1.bf16.msra.mxu0 0
        %1439 = vmatprep.subr.bf16.mxu0 0
        %1440 = vmatpush1.bf16.msra.mxu0 0
        %1441 = vmatprep.subr.bf16.mxu0 0
        %1442 = vmatpush1.bf16.msra.mxu0 0
        %1443 = vmatprep.subr.bf16.mxu0 0
        %1444 = vmatpush1.bf16.msra.mxu0 0
        %1445 = vmatprep.subr.bf16.mxu0 0
        %1446 = vmatpush1.bf16.msra.mxu0 0
        %1447 = vmatprep.subr.bf16.mxu0 0
        %1448 = vmatpush1.bf16.msra.mxu0 0
        %1449 = vmatprep.subr.bf16.mxu0 0
        %1450 = vmatpush1.bf16.msra.mxu0 %v1431
        %1451 = vmatprep.subr.bf16.mxu0 0
        %1452 = vmatpush1.bf16.msra.mxu0 %v1430
        %1453 = vmatprep.subr.bf16.mxu0 0
        %1454 = vmatpush2.bf16.msra.mxu0 0
        %1455 = vmatprep.subr.bf16.mxu0 0
        %1456 = vmatpush2.bf16.msra.mxu0 0
        %1457 = vmatprep.subr.bf16.mxu0 0
        %1458 = vmatpush2.bf16.msra.mxu0 0
        %1459 = vmatprep.subr.bf16.mxu0 0
        %1460 = vmatpush2.bf16.msra.mxu0 0
        %1461 = vmatprep.subr.bf16.mxu0 0
        %1462 = vmatpush2.bf16.msra.mxu0 0
        %1463 = vmatprep.subr.bf16.mxu0 0
        %1464 = vmatpush2.bf16.msra.mxu0 0
        %1465 = vmatprep.subr.bf16.mxu0 0
        %1466 = vmatpush2.bf16.msra.mxu0 0
        %1467 = vmatprep.subr.bf16.mxu0 0
        %1468 = vmatpush2.bf16.msra.mxu0 0
        %1469 = vmatprep.mubr.bf16.mxu0 0
        %1470 = vmatmul.mubr.bf16.gmra.mxu0 %v1435
        %v1471 = vpop.f32.mrf.mxu0
        %v1472 = vadd.f32 %v1420, %v1471
        %v1473 = vpop.f32.mrf.mxu0
        %v1474 = vpop.f32.mrf.mxu0
        %v1475 = vadd.f32 %v1420, %v1474
        %v1476 = vpop.f32.mrf.mxu0
        %1477 = vdwg.mxu0
        %v1478 = vmul.f32 %v1472, 0.5
        %v1479 = vmul.f32 %v1475, 0.5
        %v1480 = vmul.f32 %v1472, 0.70710677
        %v1481 = vmul.f32 %v1475, 0.70710677
        %v1482 = verf.f32.pop %v1480
        %v1483 = verf.f32.pop %v1481
        %v1484 = vadd.f32 %v1482, 1.0
        %v1485 = vadd.f32 %v1483, 1.0
        %v1486 = vmul.f32 %v1478, %v1484
        %v1487 = vmul.f32 %v1479, %v1485
        %v1488 = vpack.c.bf16 %v1487, %v1486
        %v1489 = vld [vmem:[%s12] sm:$0xf]
        %v1490 = vld [vmem:[%s12 + $0x4] sm:$0xf]
        %v1491 = vld [vmem:[%s12 + $0x8] sm:$0xf]
        %v1492 = vld [vmem:[%s12 + $0xc] sm:$0xf]
        %v1493 = vld [vmem:[%s12 + $0x10] sm:$0xf]
        %v1494 = vld [vmem:[%s12 + $0x14] sm:$0xf]
        %v1495 = vld [vmem:[%s12 + $0x18] sm:$0xf]
        %v1496 = vld [vmem:[%s12 + $0x1c] sm:$0xf]
        %v1497 = vld [vmem:[%s13] sm:$0x1]
        %v1499 = vlaneseq
        %v1500 = vshrl.u32 %v1499, 7
        %v1501 = vsub.s32 0, %v1500
        %v1502 = vrot.slane %v1497, %v1501
        %v1512 = vunpack.c.l.b16 %v1489
        %v1513 = vunpack.c.l.b16 %v1490
        %v1514 = vunpack.c.l.b16 %v1491
        %v1515 = vunpack.c.l.b16 %v1492
        %v1516 = vunpack.c.l.b16 %v1493
        %v1517 = vunpack.c.l.b16 %v1494
        %v1518 = vunpack.c.l.b16 %v1495
        %v1519 = vunpack.c.l.b16 %v1496
        %v1520 = vpack.c.b16 %v1513, %v1512
        %v1521 = vpack.c.b16 %v1515, %v1514
        %v1522 = vpack.c.b16 %v1517, %v1516
        %v1523 = vpack.c.b16 %v1519, %v1518
        %vm1528 = vcmask 523264
        %v1530 = vsel %vm1528, %v1488, 0
        %1532 = vmatprep.subr.bf16.mxu0 0
        %1533 = vmatpush1.bf16.msra.mxu0 0
        %1534 = vmatprep.subr.bf16.mxu0 0
        %1535 = vmatpush1.bf16.msra.mxu0 0
        %1536 = vmatprep.subr.bf16.mxu0 0
        %1537 = vmatpush1.bf16.msra.mxu0 0
        %1538 = vmatprep.subr.bf16.mxu0 0
        %1539 = vmatpush1.bf16.msra.mxu0 0
        %1540 = vmatprep.subr.bf16.mxu0 0
        %1541 = vmatpush1.bf16.msra.mxu0 %v1523
        %1542 = vmatprep.subr.bf16.mxu0 0
        %1543 = vmatpush1.bf16.msra.mxu0 %v1522
        %1544 = vmatprep.subr.bf16.mxu0 0
        %1545 = vmatpush1.bf16.msra.mxu0 %v1521
        %1546 = vmatprep.subr.bf16.mxu0 0
        %1547 = vmatpush1.bf16.msra.mxu0 %v1520
        %1548 = vmatprep.subr.bf16.mxu0 0
        %1549 = vmatpush2.bf16.msra.mxu0 0
        %1550 = vmatprep.subr.bf16.mxu0 0
        %1551 = vmatpush2.bf16.msra.mxu0 0
        %1552 = vmatprep.subr.bf16.mxu0 0
        %1553 = vmatpush2.bf16.msra.mxu0 0
        %1554 = vmatprep.subr.bf16.mxu0 0
        %1555 = vmatpush2.bf16.msra.mxu0 0
        %1556 = vmatprep.subr.bf16.mxu0 0
        %1557 = vmatpush2.bf16.msra.mxu0 0
        %1558 = vmatprep.subr.bf16.mxu0 0
        %1559 = vmatpush2.bf16.msra.mxu0 0
        %1560 = vmatprep.subr.bf16.mxu0 0
        %1561 = vmatpush2.bf16.msra.mxu0 0
        %1562 = vmatprep.subr.bf16.mxu0 0
        %1563 = vmatpush2.bf16.msra.mxu0 0
        %1564 = vmatprep.mubr.bf16.mxu0 0
        %1565 = vmatmul.mubr.bf16.gmra.mxu0 %v1530
        %v1566 = vpop.f32.mrf.mxu0
        %v1567 = vadd.f32 %v1502, %v1566
        %v1568 = vpop.f32.mrf.mxu0
        %v1569 = vpop.f32.mrf.mxu0
        %v1570 = vadd.f32 %v1502, %v1569
        %v1571 = vpop.f32.mrf.mxu0
        %1572 = vdwg.mxu0
        %v1573 = vld [vmem:[%s14] sm:$0x1]
        %v1575 = vlaneseq
        %v1576 = vshrl.u32 %v1575, 7
        %v1577 = vsub.s32 0, %v1576
        %v1578 = vrot.slane %v1573, %v1577
        %v1580 = vmul.f32 %v1578, %v1567
        %v1581 = vmul.f32 %v1578, %v1570
        %v1582 = vadd.f32 %v1364, %v1580
        %v1583 = vadd.f32 %v1365, %v1581
        %1584 = vst.msk [vmem:[%s621] sm:$0xff] %vm639, %v1582
        %1585 = vst.msk [vmem:[%s621 + $0x8] sm:$0xff] %vm639, %v1583
        %s1586 = sand.u32 %s367, 1
        %s1587 = scalar_lea.sflag [#allocation4], %s1586
        %s1588 = sand.u32 %s367, 1
        %s1589 = smul.addr %s1588, 16
        %s1590 = scalar_lea.vmem [#allocation16], %s1589
        %s1591 = sand.u32 %s393, 1
        %s1592 = scalar_lea.sflag [#allocation18], %s1591
        %s1593 = sand.u32 %s393, 1
        %s1594 = smul.addr %s1593, 64
        %s1595 = scalar_lea.vmem [#allocation17], %s1594
        // Predicated region
        $region113: #{tpu_custom_call.1} parent=79 // pred_check
          %p1596 = pneg %p377
        $region114: #{tpu_custom_call.1} parent=79 // pred_check_branch
          %1598 = sbr.rel (%p1596) target = $region116
        $region115: #{tpu_custom_call.1} parent=79 // pred_region
          %s1600 = ssub.s32 256, 256
          %1601 = vsyncadd %s1587, %s1600
          %s1602 = smul.addr %s39, 2
          %s1603 = smul.addr %s1602, 128
          %s1604 = scalar_lea.hbm %s15, %s1603
          %s1605 = sshll.u32 %s1590, 4
          %s1606 = int_to_ptr.vmem [resolvable:$true] %s1605
          %1611 = dma.vmem_to_hbm [thread:$0]  %s1606, 256, %s1604, %s1587, 128, 128, 8
        $region116: #{tpu_custom_call.1} parent=79 // pred_fallthru
          _
        // Predicated region
        $region117: #{tpu_custom_call.1} parent=79 // pred_check
          %p1612 = pneg %p403
        $region118: #{tpu_custom_call.1} parent=79 // pred_check_branch
          %1614 = sbr.rel (%p1612) target = $region120
        $region119: #{tpu_custom_call.1} parent=79 // pred_region
          %s1616 = ssub.s32 1024, 1024
          %1617 = vsyncadd %s1592, %s1616
          %s1618 = smul.addr %s39, 8
          %s1619 = smul.addr %s1618, 128
          %s1620 = scalar_lea.hbm %s16, %s1619
          %s1621 = sshll.u32 %s1595, 4
          %s1622 = int_to_ptr.vmem [resolvable:$true] %s1621
          %1627 = dma.vmem_to_hbm [thread:$0]  %s1622, 1024, %s1620, %s1592, 128, 128, 8
        $region120: #{tpu_custom_call.1} parent=79 // pred_fallthru
          _
      $region80: #{tpu_custom_call.1} parent=5 // pred_fallthru
        _
      %p1628 = scmp.le.s32.totalorder 2, %s34
      // Predicated region
      $region121: #{tpu_custom_call.1} parent=5 // pred_check
        %p1629 = pneg %p1628
      $region122: #{tpu_custom_call.1} parent=5 // pred_check_branch
        %1631 = sbr.rel (%p1629) target = $region124
      $region123: #{tpu_custom_call.1} parent=5 // pred_region
        %s1632 = ssub.s32 %s34, 2
        // Predicated region
        $region125: #{tpu_custom_call.1} parent=123 // pred_check
          %p1633 = pneg %p383
        $region126: #{tpu_custom_call.1} parent=123 // pred_check_branch
          %1635 = sbr.rel (%p1633) target = $region128
        $region127: #{tpu_custom_call.1} parent=123 // pred_region
          %s1636 = sand.u32 %s368, 1
          %s1637 = scalar_lea.sflag [#allocation4], %s1636
          %s1638 = sand.u32 %s368, 1
          %s1639 = smul.addr %s1638, 16
          %s1640 = scalar_lea.vmem [#allocation16], %s1639
          %1641 = dma.done %s1637, 256
        $region128: #{tpu_custom_call.1} parent=123 // pred_fallthru
          _
        // Predicated region
        $region129: #{tpu_custom_call.1} parent=123 // pred_check
          %p1642 = pneg %p409
        $region130: #{tpu_custom_call.1} parent=123 // pred_check_branch
          %1644 = sbr.rel (%p1642) target = $region132
        $region131: #{tpu_custom_call.1} parent=123 // pred_region
          %s1645 = sand.u32 %s394, 1
          %s1646 = scalar_lea.sflag [#allocation18], %s1645
          %s1647 = sand.u32 %s394, 1
          %s1648 = smul.addr %s1647, 64
          %s1649 = scalar_lea.vmem [#allocation17], %s1648
          %1650 = dma.done %s1646, 1024
        $region132: #{tpu_custom_call.1} parent=123 // pred_fallthru
          _
      $region124: #{tpu_custom_call.1} parent=5 // pred_fallthru
        _
    $region6: #{tpu_custom_call.1} parent=1 // loop_footer
      %s38 = sadd.s32 1, %s34
    $region7: #{tpu_custom_call.1} parent=1 // loop_footer_branch
      %33 = sbr.rel target = $region3
    $region8: #{tpu_custom_call.1} parent=1 // loop_exit
      _
    %1651 = vsyncpa [#allocation3], 1
    %s1652 = scalar_lea.sflag [#allocation3], 1
    %1653 = vsyncpa %s1652, 1
    %1654 = vsyncpa [#allocation6], 1
    %1655 = vsyncpa [#allocation9], 1
    %1656 = vsyncpa [#allocation12], 1
    %1657 = vsyncpa [#allocation15], 1
    %1658 = vsyncpa [#allocation4], 1
    %s1659 = scalar_lea.sflag [#allocation4], 1
    %1660 = vsyncpa %s1659, 1
    %1661 = vsyncpa [#allocation18], 1
    %s1662 = scalar_lea.sflag [#allocation18], 1
    %1663 = vsyncpa %s1662, 1

</llo_original>
